<compile_context>
chip_gen: v7x
topology: tpu7x:2x2x1
jax: 0.10.0
libtpu: 0.0.40
codegen_flags: <defaults>
</compile_context>

<pallas_src>
import functools

import jax
import jax.numpy as jnp
from jax import lax
from jax.experimental import pallas as pl
from jax.experimental.pallas import tpu as pltpu


_VMEM_BUDGET_BYTES = 44 * 1024 * 1024   # accounting target (fits v7x's 64 MiB)
_VMEM_LIMIT_BYTES = 48 * 1024 * 1024    # explicit scoped-VMEM limit requested


def _round_up(x, m):
    return (x + m - 1) // m * m


def _pick_tile_n(n, d, kp, requested, num_splits):
    """Row-tile size against a VMEM budget that counts lane padding (last dim
    padded to 128), the resident codebook/e2/accumulators, and double
    buffering of the moving windows."""
    d_lane = _round_up(d, 128)
    # Moving windows per row, double-buffered: x (f32), q (f32), idx (i32).
    per_row = 2 * (4 * d_lane + 4 * d_lane + 4 * 128)
    # Resident blocks (conservatively counted as double-buffered too).
    resident = 2 * (4 * kp * d_lane      # e_pad
                    + 4 * 8 * kp         # e2_half
                    + 4 * 8 * kp         # counts accumulator
                    + 4 * kp * d_lane    # dw accumulator
                    + 4 * 8 * 128)       # se accumulator
    budget = _VMEM_BUDGET_BYTES - resident
    # TODO(synk): for very large codebooks (kp*d so big that the residents
    # alone approach the budget) a Kp-block grid axis with a running-argmin
    # carry would be needed; not implemented here.
    tile = max(16, _round_up(requested, 16))
    while tile > 128 and tile * per_row > budget:
        tile //= 2
    # No point making tiles larger than each split's share of the rows.
    per_split = -(-n // num_splits)
    return max(16, min(tile, _round_up(per_split, 16)))


def _vq_kernel(x_ref, e_ref, e2h_ref, idx_ref, q_ref, cnt_ref, dw_ref, se_ref,
               *, n_valid, has_tail):
    # x_ref  : (TN, D)   tile of flattened inputs (f32, zero-padded tail rows)
    # e_ref  : (Kp, D)   codebook, rows >= K are zero (resident)
    # e2h_ref: (1, Kp)   0.5*||e||^2, cols >= K set to 1e30 (resident)
    # idx_ref: (TN, 1)   int32 nearest-code indices
    # q_ref  : (TN, D)   quantized vectors
    # cnt_ref: (1, Kp)   per-split accumulated code counts   (grid-resident)
    # dw_ref : (Kp, D)   per-split accumulated enc^T @ x     (grid-resident)
    # se_ref : (1, 1)    per-split accumulated sum((q-x)^2)  (grid-resident)
    c = pl.program_id(0)
    i = pl.program_id(1)

    @pl.when(i == 0)
    def _init():
        cnt_ref[...] = jnp.zeros_like(cnt_ref)
        dw_ref[...] = jnp.zeros_like(dw_ref)
        se_ref[...] = jnp.zeros_like(se_ref)

    x = x_ref[...]                     # (TN, D)  f32
    e = e_ref[...]                     # (Kp, D)  f32
    e2h = e2h_ref[...]                 # (1, Kp)  f32
    tn = x.shape[0]
    kp = e.shape[0]

    # argmin_k ||x - e_k||^2 == argmin_k (0.5*||e_k||^2 - <x, e_k>):
    # the ||x||^2 term is a per-row constant and is dropped from the key.
    xe = lax.dot_general(x, e, (((1,), (1,)), ((), ())),
                         preferred_element_type=jnp.float32)   # MXU (TN, Kp)
    key = e2h - xe

    # argmin with first-occurrence tie-break (matches torch.argmin).
    col = lax.broadcasted_iota(jnp.int32, key.shape, 1)
    kmin = jnp.min(key, axis=1, keepdims=True)
    idx = jnp.min(jnp.where(key == kmin, col, kp), axis=1, keepdims=True)  # (TN,1) i32
    onehot = jnp.where(col == idx, 1.0, 0.0)                               # (TN,Kp) f32

    q = jnp.dot(onehot, e, preferred_element_type=jnp.float32)             # (TN, D)

    idx_ref[...] = idx          # padded rows are sliced off in the wrapper
    q_ref[...] = q

    # dw = enc^T @ x as a dim-0 contraction (no materialized onehot.T).
    # Padded x rows are zero, so this needs no masking or gating at all.
    dw_ref[...] += lax.dot_general(onehot, x, (((0,), (0,)), ((), ())),
                                   preferred_element_type=jnp.float32)

    diff = q - x

    def _acc(oh, df):
        cnt_ref[...] += jnp.sum(oh, axis=0, keepdims=True)                 # (1, Kp)
        se_ref[...] += jnp.sum(jnp.sum(df * df, axis=1, keepdims=True),
                               axis=0, keepdims=True)                      # (1, 1)

    if not has_tail:
        _acc(onehot, diff)
    else:
        start = (c * pl.num_programs(1) + i) * tn   # global row offset of this tile

        @pl.when(start + tn <= n_valid)             # steady state: no mask
        def _full():
            _acc(onehot, diff)

        @pl.when(jnp.logical_and(start < n_valid, start + tn > n_valid))
        def _boundary():                            # only the boundary tile pays
            row = lax.broadcasted_iota(jnp.int32, (tn, 1), 0) + start
            m = (row < n_valid).astype(jnp.float32)
            _acc(onehot * m, diff * m)
        # start >= n_valid: fully padded tile -> contributes nothing.


def _vq_pallas(flat_x, embedding, *, tile_n=4096, num_splits=2):
    n, d = flat_x.shape
    k = embedding.shape[0]
    kp = _round_up(k, 128)            # lane-dense codebook columns

    e_pad = jnp.zeros((kp, d), jnp.float32).at[:k, :].set(
        embedding.astype(jnp.float32))
    e2h = 0.5 * jnp.sum(e_pad * e_pad, axis=1)               # hoisted out of kernel
    e2h = jnp.where(jnp.arange(kp) < k, e2h, jnp.float32(1e30)).reshape(1, kp)

    tile_n = _pick_tile_n(n, d, kp, tile_n, num_splits)
    n_pad = _round_up(n, tile_n * num_splits)
    tiles_per_split = n_pad // (tile_n * num_splits)

    x = flat_x.astype(jnp.float32)
    if n_pad != n:
        x = jnp.pad(x, ((0, n_pad - n), (0, 0)))             # zero-pad tail rows

    kernel = functools.partial(_vq_kernel, n_valid=n, has_tail=(n_pad != n))

    def row_map(c, i):
        return (c * tiles_per_split + i, 0)

    idx, quant, counts, dw, sq_err = pl.pallas_call(
        kernel,
        out_shape=(
            jax.ShapeDtypeStruct((n_pad, 1), jnp.int32),              # indices
            jax.ShapeDtypeStruct((n_pad, d), jnp.float32),            # quantized
            jax.ShapeDtypeStruct((num_splits, 1, kp), jnp.float32),   # counts
            jax.ShapeDtypeStruct((num_splits, kp, d), jnp.float32),   # dw
            jax.ShapeDtypeStruct((num_splits, 1, 1), jnp.float32),    # sum((q-x)^2)
        ),
        grid_spec=pltpu.PrefetchScalarGridSpec(
            num_scalar_prefetch=0,
            grid=(num_splits, tiles_per_split),
            in_specs=[
                pl.BlockSpec((tile_n, d), row_map),                 # x tile
                pl.BlockSpec((kp, d), lambda c, i: (0, 0)),         # codebook (resident)
                pl.BlockSpec((1, kp), lambda c, i: (0, 0)),         # e2_half (resident)
            ],
            out_specs=[
                pl.BlockSpec((tile_n, 1), row_map),
                pl.BlockSpec((tile_n, d), row_map),
                pl.BlockSpec((None, 1, kp), lambda c, i: (c, 0, 0)),   # per-split acc
                pl.BlockSpec((None, kp, d), lambda c, i: (c, 0, 0)),   # per-split acc
                pl.BlockSpec((None, 1, 1), lambda c, i: (c, 0, 0)),    # per-split acc
            ],
        ),
        compiler_params=pltpu.CompilerParams(
            dimension_semantics=("parallel", "arbitrary"),   # splits x row-tiles
            vmem_limit_bytes=_VMEM_LIMIT_BYTES),
    )(x, e_pad, e2h)

    counts = jnp.sum(counts, axis=0)[0, :k]    # reduce per-split partials in XLA
    dw = jnp.sum(dw, axis=0)[:k]
    sq_err = jnp.sum(sq_err)
    return idx[:n, 0], quant[:n], counts, dw, sq_err


@functools.partial(jax.jit, static_argnames=("commitment_cost", "decay", "epsilon",
                                              "is_training", "tile_n", "num_splits"))
def vector_quantizer_ema_forward(inputs, embedding_w, ema_cluster_size, ema_w,
                                 *, commitment_cost, decay, epsilon=1e-5,
                                 is_training=True, tile_n=4096, num_splits=2):
    input_shape = inputs.shape
    k, d = embedding_w.shape
    flat_input = inputs.reshape(-1, d).astype(jnp.float32)
    n = flat_input.shape[0]

    idx, quant_flat, counts, dw, sq_err = _vq_pallas(
        flat_input, embedding_w, tile_n=tile_n, num_splits=num_splits)
    quantized = quant_flat.reshape(input_shape)
    # Dense encodings reconstructed outside the kernel (kernel only writes
    # 4 B/row of indices instead of a dense one-hot).
    encodings = jax.nn.one_hot(idx, k, dtype=jnp.float32)

    # EMA state updates (torch buffers; returned as new state here).
    if is_training:
        new_cluster = ema_cluster_size * decay + (1.0 - decay) * counts
        n_tot = jnp.sum(new_cluster)
        new_cluster = (new_cluster + epsilon) / (n_tot + k * epsilon) * n_tot
        new_ema_w = ema_w * decay + (1.0 - decay) * dw
        new_embedding = new_ema_w / new_cluster[:, None]
    else:
        new_cluster, new_ema_w, new_embedding = ema_cluster_size, ema_w, embedding_w

    # TODO(synk): forward-only; gradients through the fused Pallas outputs
    # (quantized / loss) would need a custom_vjp around the pallas_call.
    e_latent_loss = sq_err / (n * d)               # == mean((q.detach() - x)^2)
    loss = commitment_cost * e_latent_loss
    quantized_st = inputs + lax.stop_gradient(quantized - inputs)

    avg_probs = counts / n                         # == mean(encodings, axis=0)
    perplexity = jnp.exp(-jnp.sum(avg_probs * jnp.log(avg_probs + 1e-10)))

    return (loss, quantized_st, perplexity, encodings,
            new_cluster, new_ema_w, new_embedding)


def _reference(inputs, embedding_w):
    # Pure-JAX reference of the hot path for a sanity check.
    d = embedding_w.shape[1]
    flat = inputs.reshape(-1, d).astype(jnp.float32)
    dist = (jnp.sum(flat ** 2, axis=1, keepdims=True)
            + jnp.sum(embedding_w ** 2, axis=1)
            - 2.0 * jnp.matmul(flat, embedding_w.T))
    idx = jnp.argmin(dist, axis=1)
    enc = jax.nn.one_hot(idx, embedding_w.shape[0], dtype=jnp.float32)
    quant = jnp.matmul(enc, embedding_w).reshape(inputs.shape)
    return enc, quant


if __name__ == "__main__":
    num_embeddings = 64
    embedding_dim = 32
    commitment_cost = 0.25
    decay = 0.99
    epsilon = 1e-5

    key = jax.random.PRNGKey(0)
    k_in, k_emb, k_ema = jax.random.split(key, 3)

    # channels-last (B, H, W, D), D = embedding_dim  ->  N = 2*9*8 = 144 rows
    inputs = jax.random.normal(k_in, (2, 9, 8, embedding_dim), dtype=jnp.float32)
    embedding_w = jax.random.normal(k_emb, (num_embeddings, embedding_dim), jnp.float32)
    ema_w = jax.random.normal(k_ema, (num_embeddings, embedding_dim), jnp.float32)
    ema_cluster_size = jnp.zeros((num_embeddings,), jnp.float32)

    # Pure-JAX reference of the whole forward for sanity checks.
    ref_enc, ref_quant = _reference(inputs, embedding_w)
    flat = inputs.reshape(-1, embedding_dim)
    ref_counts = jnp.sum(ref_enc, axis=0)
    ref_cluster = ema_cluster_size * decay + (1.0 - decay) * ref_counts
    ref_n = jnp.sum(ref_cluster)
    ref_cluster = (ref_cluster + epsilon) / (ref_n + num_embeddings * epsilon) * ref_n
    ref_dw = jnp.matmul(ref_enc.T, flat, precision=lax.Precision.HIGHEST)
    ref_ema_w = ema_w * decay + (1.0 - decay) * ref_dw
    ref_emb = ref_ema_w / ref_cluster[:, None]
    ref_loss = commitment_cost * jnp.mean((ref_quant - inputs) ** 2)
    ref_avg = jnp.mean(ref_enc, axis=0)
    ref_perp = jnp.exp(-jnp.sum(ref_avg * jnp.log(ref_avg + 1e-10)))
    ref_quant_st = inputs + lax.stop_gradient(ref_quant - inputs)

    # Exercise: default large tile (2-way split, boundary tile), a small tile
    # (multi-step grid with a fully-padded skip tile), and a no-tail single
    # split (unmasked single-branch path).
    for tn, ns in ((4096, 2), (64, 2), (256, 1)):
        out = vector_quantizer_ema_forward(
            inputs, embedding_w, ema_cluster_size, ema_w,
            commitment_cost=commitment_cost, decay=decay, epsilon=epsilon,
            is_training=True, tile_n=tn, num_splits=ns)
        out = jax.block_until_ready(out)
        (loss, quantized, perplexity, encodings,
         new_cluster, new_ema_w, new_emb) = out

        tag = f"(tile_n={tn}, num_splits={ns})"
        assert jnp.allclose(encodings, ref_enc), f"encodings mismatch {tag}"
        assert jnp.allclose(quantized, ref_quant_st, atol=1e-5), f"quantized mismatch {tag}"
        assert jnp.allclose(new_cluster, ref_cluster, atol=1e-5), f"cluster mismatch {tag}"
        # Looser tolerances: MXU pass-precision may differ from XLA's matmuls.
        assert jnp.allclose(new_ema_w, ref_ema_w, rtol=1e-2, atol=2e-2), f"ema_w mismatch {tag}"
        assert jnp.allclose(new_emb, ref_emb, rtol=1e-2, atol=2e-2), f"embedding mismatch {tag}"
        assert jnp.allclose(loss, ref_loss, rtol=2e-2), f"loss mismatch {tag}"
        assert jnp.allclose(perplexity, ref_perp, rtol=1e-3), f"perplexity mismatch {tag}"

    print("KERNEL_OK")
</pallas_src>

<mosaic_0001>
module attributes {stable_mosaic.version = 11 : i64} {
  func.func @_vq_kernel(%arg0: i32, %arg1: i32, %arg2: memref<80x32xf32, #tpu.memory_space<vmem>>, %arg3: memref<128x32xf32, #tpu.memory_space<vmem>>, %arg4: memref<1x128xf32, #tpu.memory_space<vmem>>, %arg5: memref<80x1xi32, #tpu.memory_space<vmem>>, %arg6: memref<80x32xf32, #tpu.memory_space<vmem>>, %arg7: memref<1x1x128xf32, #tpu.memory_space<vmem>>, %arg8: memref<1x128x32xf32, #tpu.memory_space<vmem>>, %arg9: memref<1x1x1xf32, #tpu.memory_space<vmem>>) attributes {dimension_semantics = [#tpu.dimension_semantics<parallel>, #tpu.dimension_semantics<arbitrary>], iteration_bounds = array<i64: 2, 1>, scalar_prefetch = 0 : i64, scratch_operands = 0 : i64, tpu.core_type = #tpu.core_type<tc>, window_params = [{transform_indices = @transform_0, window_bounds = array<i64: 80, 32>}, {pipeline_mode = #tpu.pipeline_mode<synchronous>, transform_indices = @transform_1, window_bounds = array<i64: 128, 32>}, {pipeline_mode = #tpu.pipeline_mode<synchronous>, transform_indices = @transform_2, window_bounds = array<i64: 1, 128>}, {transform_indices = @transform_3, window_bounds = array<i64: 80, 1>}, {transform_indices = @transform_4, window_bounds = array<i64: 80, 32>}, {transform_indices = @transform_5, window_bounds = array<i64: 1, 1, 128>}, {transform_indices = @transform_6, window_bounds = array<i64: 1, 128, 32>}, {transform_indices = @transform_7, window_bounds = array<i64: 1, 1, 1>}]} {
    %c0_i32 = arith.constant 0 : i32
    %0 = arith.cmpi eq, %arg1, %c0_i32 : i32
    %1 = arith.extui %0 : i1 to i32
    %c0_i32_0 = arith.constant 0 : i32
    %2 = arith.cmpi ne, %1, %c0_i32_0 : i32
    scf.if %2 {
      %cst_28 = arith.constant 0.000000e+00 : f32
      %47 = vector.broadcast %cst_28 : f32 to vector<1x128xf32>
      %c0_29 = arith.constant 0 : index
      %c0_30 = arith.constant 0 : index
      %c0_31 = arith.constant 0 : index
      %48 = vector.load %arg7[%c0_29, %c0_30, %c0_31] : memref<1x1x128xf32, #tpu.memory_space<vmem>>, vector<1x1x128xf32>
      %49 = vector.shape_cast %48 : vector<1x1x128xf32> to vector<1x128xf32>
      %50 = vector.shape_cast %47 : vector<1x128xf32> to vector<1x1x128xf32>
      tpu.vector_store %arg7[%c0_29, %c0_30, %c0_31], %50 {strides = array<i32>} : memref<1x1x128xf32, #tpu.memory_space<vmem>>, vector<1x1x128xf32>,
      %cst_32 = arith.constant 0.000000e+00 : f32
      %51 = vector.broadcast %cst_32 : f32 to vector<128x32xf32>
      %c0_33 = arith.constant 0 : index
      %c0_34 = arith.constant 0 : index
      %c0_35 = arith.constant 0 : index
      %52 = vector.load %arg8[%c0_33, %c0_34, %c0_35] : memref<1x128x32xf32, #tpu.memory_space<vmem>>, vector<1x128x32xf32>
      %53 = vector.shape_cast %52 : vector<1x128x32xf32> to vector<128x32xf32>
      %54 = vector.shape_cast %51 : vector<128x32xf32> to vector<1x128x32xf32>
      tpu.vector_store %arg8[%c0_33, %c0_34, %c0_35], %54 {strides = array<i32>} : memref<1x128x32xf32, #tpu.memory_space<vmem>>, vector<1x128x32xf32>,
      %cst_36 = arith.constant 0.000000e+00 : f32
      %55 = vector.broadcast %cst_36 : f32 to vector<1x1xf32>
      %c0_37 = arith.constant 0 : index
      %c0_38 = arith.constant 0 : index
      %c0_39 = arith.constant 0 : index
      %56 = vector.load %arg9[%c0_37, %c0_38, %c0_39] : memref<1x1x1xf32, #tpu.memory_space<vmem>>, vector<1x1x1xf32>
      %57 = vector.shape_cast %56 : vector<1x1x1xf32> to vector<1x1xf32>
      %58 = vector.shape_cast %55 : vector<1x1xf32> to vector<1x1x1xf32>
      tpu.vector_store %arg9[%c0_37, %c0_38, %c0_39], %58 {strides = array<i32>} : memref<1x1x1xf32, #tpu.memory_space<vmem>>, vector<1x1x1xf32>,
    } else {
    }
    %c0 = arith.constant 0 : index
    %c0_1 = arith.constant 0 : index
    %3 = vector.load %arg2[%c0, %c0_1] : memref<80x32xf32, #tpu.memory_space<vmem>>, vector<80x32xf32>
    %c0_2 = arith.constant 0 : index
    %c0_3 = arith.constant 0 : index
    %4 = vector.load %arg3[%c0_2, %c0_3] : memref<128x32xf32, #tpu.memory_space<vmem>>, vector<128x32xf32>
    %c0_4 = arith.constant 0 : index
    %c0_5 = arith.constant 0 : index
    %5 = vector.load %arg4[%c0_4, %c0_5] : memref<1x128xf32, #tpu.memory_space<vmem>>, vector<1x128xf32>
    %cst = arith.constant dense<0.000000e+00> : vector<80x128xf32>
    %6 = tpu.matmul %3, %4, %cst {dimension_numbers = #tpu.dot_dimension_numbers<[1], [1], [0], [0], [0, 0, 1, 0], [], []>} : vector<80x32xf32>, vector<128x32xf32>, vector<80x128xf32> -> vector<80x128xf32>
    %7 = vector.broadcast %5 : vector<1x128xf32> to vector<80x128xf32>
    %8 = arith.subf %7, %6 : vector<80x128xf32>
    %9 = tpu.iota {dimensions = array<i32: 1>} : vector<80x128xi32>
    %cst_6 = arith.constant dense<0x7F800000> : vector<80xf32>
    %10 = vector.multi_reduction <minimumf>, %8, %cst_6 [1] : vector<80x128xf32> to vector<80xf32>
    %11 = vector.shape_cast %10 : vector<80xf32> to vector<80x1xf32>
    %12 = vector.broadcast %11 : vector<80x1xf32> to vector<80x128xf32>
    %13 = arith.cmpf oeq, %8, %12 : vector<80x128xf32>
    %c128_i32 = arith.constant 128 : i32
    %14 = vector.broadcast %c128_i32 : i32 to vector<80x128xi32>
    %15 = arith.select %13, %9, %14 : vector<80x128xi1>, vector<80x128xi32>
    %cst_7 = arith.constant dense<2147483647> : vector<80xi32>
    %16 = vector.multi_reduction <minsi>, %15, %cst_7 [1] : vector<80x128xi32> to vector<80xi32>
    %17 = vector.shape_cast %16 : vector<80xi32> to vector<80x1xi32>
    %18 = vector.broadcast %17 : vector<80x1xi32> to vector<80x128xi32>
    %19 = arith.cmpi eq, %9, %18 : vector<80x128xi32>
    %cst_8 = arith.constant 1.000000e+00 : f32
    %cst_9 = arith.constant 0.000000e+00 : f32
    %20 = vector.broadcast %cst_8 : f32 to vector<80x128xf32>
    %21 = vector.broadcast %cst_9 : f32 to vector<80x128xf32>
    %22 = arith.select %19, %20, %21 : vector<80x128xi1>, vector<80x128xf32>
    %cst_10 = arith.constant dense<0.000000e+00> : vector<80x32xf32>
    %23 = tpu.matmul %22, %4, %cst_10 {dimension_numbers = #tpu.dot_dimension_numbers<[1], [0], [0], [1], [0, 0, 1, 1], [], []>} : vector<80x128xf32>, vector<128x32xf32>, vector<80x32xf32> -> vector<80x32xf32>
    %c0_11 = arith.constant 0 : index
    %c0_12 = arith.constant 0 : index
    %24 = vector.load %arg5[%c0_11, %c0_12] : memref<80x1xi32, #tpu.memory_space<vmem>>, vector<80x1xi32>
    tpu.vector_store %arg5[%c0_11, %c0_12], %17 {strides = array<i32>} : memref<80x1xi32, #tpu.memory_space<vmem>>, vector<80x1xi32>,
    %c0_13 = arith.constant 0 : index
    %c0_14 = arith.constant 0 : index
    %25 = vector.load %arg6[%c0_13, %c0_14] : memref<80x32xf32, #tpu.memory_space<vmem>>, vector<80x32xf32>
    tpu.vector_store %arg6[%c0_13, %c0_14], %23 {strides = array<i32>} : memref<80x32xf32, #tpu.memory_space<vmem>>, vector<80x32xf32>,
    %c0_15 = arith.constant 0 : index
    %c0_16 = arith.constant 0 : index
    %c0_17 = arith.constant 0 : index
    %26 = vector.load %arg8[%c0_15, %c0_16, %c0_17] : memref<1x128x32xf32, #tpu.memory_space<vmem>>, vector<1x128x32xf32>
    %27 = vector.shape_cast %26 : vector<1x128x32xf32> to vector<128x32xf32>
    %cst_18 = arith.constant dense<0.000000e+00> : vector<128x32xf32>
    %28 = tpu.matmul %22, %3, %cst_18 {dimension_numbers = #tpu.dot_dimension_numbers<[0], [0], [1], [1], [0, 1, 1, 1], [], []>} : vector<80x128xf32>, vector<80x32xf32>, vector<128x32xf32> -> vector<128x32xf32>
    %29 = arith.addf %27, %28 : vector<128x32xf32>
    %c0_19 = arith.constant 0 : index
    %c0_20 = arith.constant 0 : index
    %c0_21 = arith.constant 0 : index
    %30 = vector.load %arg8[%c0_19, %c0_20, %c0_21] : memref<1x128x32xf32, #tpu.memory_space<vmem>>, vector<1x128x32xf32>
    %31 = vector.shape_cast %30 : vector<1x128x32xf32> to vector<128x32xf32>
    %32 = vector.shape_cast %29 : vector<128x32xf32> to vector<1x128x32xf32>
    tpu.vector_store %arg8[%c0_19, %c0_20, %c0_21], %32 {strides = array<i32>} : memref<1x128x32xf32, #tpu.memory_space<vmem>>, vector<1x128x32xf32>,
    %33 = arith.subf %23, %3 : vector<80x32xf32>
    %c1_i32 = arith.constant 1 : i32
    %34 = arith.muli %arg0, %c1_i32 : i32
    %35 = arith.addi %34, %arg1 : i32
    %c80_i32 = arith.constant 80 : i32
    %36 = arith.muli %35, %c80_i32 : i32
    %c80_i32_22 = arith.constant 80 : i32
    %37 = arith.addi %36, %c80_i32_22 : i32
    %c144_i32 = arith.constant 144 : i32
    %38 = arith.cmpi sle, %37, %c144_i32 : i32
    %39 = arith.extui %38 : i1 to i32
    %c0_i32_23 = arith.constant 0 : i32
    %40 = arith.cmpi ne, %39, %c0_i32_23 : i32
    scf.if %40 {
      %c0_28 = arith.constant 0 : index
      %c0_29 = arith.constant 0 : index
      %c0_30 = arith.constant 0 : index
      %47 = vector.load %arg7[%c0_28, %c0_29, %c0_30] : memref<1x1x128xf32, #tpu.memory_space<vmem>>, vector<1x1x128xf32>
      %48 = vector.shape_cast %47 : vector<1x1x128xf32> to vector<1x128xf32>
      %cst_31 = arith.constant dense<0.000000e+00> : vector<128xf32>
      %49 = vector.multi_reduction <add>, %22, %cst_31 [0] : vector<80x128xf32> to vector<128xf32>
      %50 = vector.shape_cast %49 : vector<128xf32> to vector<1x128xf32>
      %51 = arith.addf %48, %50 : vector<1x128xf32>
      %c0_32 = arith.constant 0 : index
      %c0_33 = arith.constant 0 : index
      %c0_34 = arith.constant 0 : index
      %52 = vector.load %arg7[%c0_32, %c0_33, %c0_34] : memref<1x1x128xf32, #tpu.memory_space<vmem>>, vector<1x1x128xf32>
      %53 = vector.shape_cast %52 : vector<1x1x128xf32> to vector<1x128xf32>
      %54 = vector.shape_cast %51 : vector<1x128xf32> to vector<1x1x128xf32>
      tpu.vector_store %arg7[%c0_32, %c0_33, %c0_34], %54 {strides = array<i32>} : memref<1x1x128xf32, #tpu.memory_space<vmem>>, vector<1x1x128xf32>,
      %c0_35 = arith.constant 0 : index
      %c0_36 = arith.constant 0 : index
      %c0_37 = arith.constant 0 : index
      %55 = vector.load %arg9[%c0_35, %c0_36, %c0_37] : memref<1x1x1xf32, #tpu.memory_space<vmem>>, vector<1x1x1xf32>
      %56 = vector.shape_cast %55 : vector<1x1x1xf32> to vector<1x1xf32>
      %57 = arith.mulf %33, %33 : vector<80x32xf32>
      %cst_38 = arith.constant dense<0.000000e+00> : vector<80xf32>
      %58 = vector.multi_reduction <add>, %57, %cst_38 [1] : vector<80x32xf32> to vector<80xf32>
      %59 = vector.shape_cast %58 : vector<80xf32> to vector<80x1xf32>
      %cst_39 = arith.constant dense<0.000000e+00> : vector<1xf32>
      %60 = vector.multi_reduction <add>, %59, %cst_39 [0] : vector<80x1xf32> to vector<1xf32>
      %61 = vector.shape_cast %60 : vector<1xf32> to vector<1x1xf32>
      %62 = arith.addf %56, %61 : vector<1x1xf32>
      %c0_40 = arith.constant 0 : index
      %c0_41 = arith.constant 0 : index
      %c0_42 = arith.constant 0 : index
      %63 = vector.load %arg9[%c0_40, %c0_41, %c0_42] : memref<1x1x1xf32, #tpu.memory_space<vmem>>, vector<1x1x1xf32>
      %64 = vector.shape_cast %63 : vector<1x1x1xf32> to vector<1x1xf32>
      %65 = vector.shape_cast %62 : vector<1x1xf32> to vector<1x1x1xf32>
      tpu.vector_store %arg9[%c0_40, %c0_41, %c0_42], %65 {strides = array<i32>} : memref<1x1x1xf32, #tpu.memory_space<vmem>>, vector<1x1x1xf32>,
    } else {
    }
    %c144_i32_24 = arith.constant 144 : i32
    %41 = arith.cmpi slt, %36, %c144_i32_24 : i32
    %c80_i32_25 = arith.constant 80 : i32
    %42 = arith.addi %36, %c80_i32_25 : i32
    %c144_i32_26 = arith.constant 144 : i32
    %43 = arith.cmpi sgt, %42, %c144_i32_26 : i32
    %44 = arith.andi %41, %43 : i1
    %45 = arith.extui %44 : i1 to i32
    %c0_i32_27 = arith.constant 0 : i32
    %46 = arith.cmpi ne, %45, %c0_i32_27 : i32
    scf.if %46 {
      %47 = tpu.iota {dimensions = array<i32: 0>} : vector<80x1xi32>
      %48 = vector.broadcast %36 : i32 to vector<80x1xi32>
      %49 = arith.addi %47, %48 : vector<80x1xi32>
      %c144_i32_28 = arith.constant 144 : i32
      %50 = vector.broadcast %c144_i32_28 : i32 to vector<80x1xi32>
      %51 = arith.cmpi slt, %49, %50 : vector<80x1xi32>
      %52 = arith.extui %51 : vector<80x1xi1> to vector<80x1xi32>
      %53 = arith.sitofp %52 : vector<80x1xi32> to vector<80x1xf32>
      %54 = vector.broadcast %53 : vector<80x1xf32> to vector<80x128xf32>
      %55 = arith.mulf %22, %54 : vector<80x128xf32>
      %56 = vector.broadcast %53 : vector<80x1xf32> to vector<80x32xf32>
      %57 = arith.mulf %33, %56 : vector<80x32xf32>
      %c0_29 = arith.constant 0 : index
      %c0_30 = arith.constant 0 : index
      %c0_31 = arith.constant 0 : index
      %58 = vector.load %arg7[%c0_29, %c0_30, %c0_31] : memref<1x1x128xf32, #tpu.memory_space<vmem>>, vector<1x1x128xf32>
      %59 = vector.shape_cast %58 : vector<1x1x128xf32> to vector<1x128xf32>
      %cst_32 = arith.constant dense<0.000000e+00> : vector<128xf32>
      %60 = vector.multi_reduction <add>, %55, %cst_32 [0] : vector<80x128xf32> to vector<128xf32>
      %61 = vector.shape_cast %60 : vector<128xf32> to vector<1x128xf32>
      %62 = arith.addf %59, %61 : vector<1x128xf32>
      %c0_33 = arith.constant 0 : index
      %c0_34 = arith.constant 0 : index
      %c0_35 = arith.constant 0 : index
      %63 = vector.load %arg7[%c0_33, %c0_34, %c0_35] : memref<1x1x128xf32, #tpu.memory_space<vmem>>, vector<1x1x128xf32>
      %64 = vector.shape_cast %63 : vector<1x1x128xf32> to vector<1x128xf32>
      %65 = vector.shape_cast %62 : vector<1x128xf32> to vector<1x1x128xf32>
      tpu.vector_store %arg7[%c0_33, %c0_34, %c0_35], %65 {strides = array<i32>} : memref<1x1x128xf32, #tpu.memory_space<vmem>>, vector<1x1x128xf32>,
      %c0_36 = arith.constant 0 : index
      %c0_37 = arith.constant 0 : index
      %c0_38 = arith.constant 0 : index
      %66 = vector.load %arg9[%c0_36, %c0_37, %c0_38] : memref<1x1x1xf32, #tpu.memory_space<vmem>>, vector<1x1x1xf32>
      %67 = vector.shape_cast %66 : vector<1x1x1xf32> to vector<1x1xf32>
      %68 = arith.mulf %57, %57 : vector<80x32xf32>
      %cst_39 = arith.constant dense<0.000000e+00> : vector<80xf32>
      %69 = vector.multi_reduction <add>, %68, %cst_39 [1] : vector<80x32xf32> to vector<80xf32>
      %70 = vector.shape_cast %69 : vector<80xf32> to vector<80x1xf32>
      %cst_40 = arith.constant dense<0.000000e+00> : vector<1xf32>
      %71 = vector.multi_reduction <add>, %70, %cst_40 [0] : vector<80x1xf32> to vector<1xf32>
      %72 = vector.shape_cast %71 : vector<1xf32> to vector<1x1xf32>
      %73 = arith.addf %67, %72 : vector<1x1xf32>
      %c0_41 = arith.constant 0 : index
      %c0_42 = arith.constant 0 : index
      %c0_43 = arith.constant 0 : index
      %74 = vector.load %arg9[%c0_41, %c0_42, %c0_43] : memref<1x1x1xf32, #tpu.memory_space<vmem>>, vector<1x1x1xf32>
      %75 = vector.shape_cast %74 : vector<1x1x1xf32> to vector<1x1xf32>
      %76 = vector.shape_cast %73 : vector<1x1xf32> to vector<1x1x1xf32>
      tpu.vector_store %arg9[%c0_41, %c0_42, %c0_43], %76 {strides = array<i32>} : memref<1x1x1xf32, #tpu.memory_space<vmem>>, vector<1x1x1xf32>,
    } else {
    }
    return
  }
  func.func @transform_0(%arg0: i32, %arg1: i32) -> (i32, i32) {
    %c1_i32 = arith.constant 1 : i32
    %0 = arith.muli %arg0, %c1_i32 : i32
    %1 = arith.addi %0, %arg1 : i32
    %c0_i32 = arith.constant 0 : i32
    %c0_i32_0 = arith.constant 0 : i32
    return %1, %c0_i32 : i32, i32
  }
  func.func @transform_1(%arg0: i32, %arg1: i32) -> (i32, i32) {
    %c0_i32 = arith.constant 0 : i32
    %c0_i32_0 = arith.constant 0 : i32
    %c0_i32_1 = arith.constant 0 : i32
    return %c0_i32, %c0_i32_0 : i32, i32
  }
  func.func @transform_2(%arg0: i32, %arg1: i32) -> (i32, i32) {
    %c0_i32 = arith.constant 0 : i32
    %c0_i32_0 = arith.constant 0 : i32
    %c0_i32_1 = arith.constant 0 : i32
    return %c0_i32, %c0_i32_0 : i32, i32
  }
  func.func @transform_3(%arg0: i32, %arg1: i32) -> (i32, i32) {
    %c1_i32 = arith.constant 1 : i32
    %0 = arith.muli %arg0, %c1_i32 : i32
    %1 = arith.addi %0, %arg1 : i32
    %c0_i32 = arith.constant 0 : i32
    %c0_i32_0 = arith.constant 0 : i32
    return %1, %c0_i32 : i32, i32
  }
  func.func @transform_4(%arg0: i32, %arg1: i32) -> (i32, i32) {
    %c1_i32 = arith.constant 1 : i32
    %0 = arith.muli %arg0, %c1_i32 : i32
    %1 = arith.addi %0, %arg1 : i32
    %c0_i32 = arith.constant 0 : i32
    %c0_i32_0 = arith.constant 0 : i32
    return %1, %c0_i32 : i32, i32
  }
  func.func @transform_5(%arg0: i32, %arg1: i32) -> (i32, i32, i32) {
    %c0_i32 = arith.constant 0 : i32
    %c0_i32_0 = arith.constant 0 : i32
    %c0_i32_1 = arith.constant 0 : i32
    return %arg0, %c0_i32, %c0_i32_0 : i32, i32, i32
  }
  func.func @transform_6(%arg0: i32, %arg1: i32) -> (i32, i32, i32) {
    %c0_i32 = arith.constant 0 : i32
    %c0_i32_0 = arith.constant 0 : i32
    %c0_i32_1 = arith.constant 0 : i32
    return %arg0, %c0_i32, %c0_i32_0 : i32, i32, i32
  }
  func.func @transform_7(%arg0: i32, %arg1: i32) -> (i32, i32, i32) {
    %c0_i32 = arith.constant 0 : i32
    %c0_i32_0 = arith.constant 0 : i32
    %c0_i32_1 = arith.constant 0 : i32
    return %arg0, %c0_i32, %c0_i32_0 : i32, i32, i32
  }
}

</mosaic_0001>

<llo_original>
// kernel: vector_quantizer_ema_forward.1
$region0: #{vector_quantizer_ema_forward.1}
  #allocation0 [shape = 'u32[]', space=smem, size = 0x4, offset = 0x4, fixed_abs, tag = 'smem constant byte address 0x4 - core index']
  #allocation1 [shape = 'u32[144,128]{1,0:T(1,128)}', space=vmem, size = 0x12000, scoped, tag = 'internal scratch']
  %s0 = inlined_call_operand.vmem [shape: f32[160,32], index: 0, kind: input, shape index: {}]
  %s1 = inlined_call_operand.vmem [shape: f32[128,32], index: 1, kind: input, shape index: {}]
  %s2 = inlined_call_operand.vmem [shape: f32[1,128], index: 2, kind: input, shape index: {}]
  %s3 = inlined_call_operand.vmem [shape: s32[160,1], index: 3, kind: output, shape index: {0}]
  %s4 = inlined_call_operand.vmem [shape: f32[160,32], index: 4, kind: output, shape index: {1}]
  %s5 = inlined_call_operand.vmem [shape: f32[2,1,128], index: 5, kind: output, shape index: {2}]
  %s6 = inlined_call_operand.vmem [shape: f32[2,128,32], index: 6, kind: output, shape index: {3}]
  %s7 = inlined_call_operand.vmem [shape: f32[2,1,1], index: 7, kind: output, shape index: {4}]
  %8 = xla_tuple %s3, %s4, %s5, %s6, %s7
  %s9 = sld [smem:[#allocation0]]
  $region89: #{vector_quantizer_ema_forward.1} parent=0
    _
  %s11 = ssub.s32 1, %s9
  %s12 = scalar_select 0, %s11, %s9
  loop: start=0, step=1, limit=4
  $region2: #{vector_quantizer_ema_forward.1} parent=0 // loop_pre_header
    _
  $region3: #{vector_quantizer_ema_forward.1} parent=0 // loop_header
    %s14 = sphi 0, %s18
    %p15 = scmp.ge.s32.totalorder %s14, 4
    %s21 = sphi 0, %s33
    %s22 = sphi 0, %s29
    %s23 = sphi 0, %s21
    %s24 = sphi 0, %s22
    %s25 = sphi 0, %s23
    %s26 = sphi 0, %s24
    %s38 = sphi 0, %s40
    %s41 = sphi 0, %s38
    %s42 = sphi 0, %s41
    %s58 = sphi 0, %s42
    %s62 = sphi 0, %s62
    %s64 = sphi 0, %s62
    %s65 = sphi 0, %s64
    %s79 = sphi 0, %s65
    %s83 = sphi 0, %s83
    %s85 = sphi 0, %s83
    %s86 = sphi 0, %s85
    %s100 = sphi 0, %s86
    %s108 = sphi 0, %s110
    %s111 = sphi 0, %s108
    %s112 = sphi 0, %s111
    %s128 = sphi 0, %s112
    %s136 = sphi 0, %s138
    %s139 = sphi 0, %s136
    %s140 = sphi 0, %s139
    %s156 = sphi 0, %s140
    %s162 = sphi 0, %s164
    %s165 = sphi 0, %s162
    %s166 = sphi 0, %s165
    %s182 = sphi 0, %s166
    %s188 = sphi 0, %s190
    %s191 = sphi 0, %s188
    %s192 = sphi 0, %s191
    %s208 = sphi 0, %s192
    %s214 = sphi 0, %s216
    %s217 = sphi 0, %s214
    %s218 = sphi 0, %s217
    %s234 = sphi 0, %s218
  $region4: #{vector_quantizer_ema_forward.1} parent=0 // loop_header_branch
    %17 = sbr.rel (%p15) target = $region8
  $region5: #{vector_quantizer_ema_forward.1} parent=0 // loop_body
    %s19 = ssub.s32 %s14, 1
    %s20 = ssub.s32 %s14, 2
    %s27 = sadd.s32 1, %s22
    %p28 = scmp.ge.s32.totalorder %s27, 1
    %s29 = scalar_select %p28, 0, %s27
    %s30 = sadd.s32 1, %s21
    %s31 = scalar_select %p28, %s30, %s21
    %p32 = scmp.ge.s32.totalorder %s31, 2
    %s33 = scalar_select %p32, 0, %s31
    %s34 = sadd.s32 %s21, %s22
    %s35 = sadd.s32 %s33, %s29
    %s36 = ssub.s32 %s34, %s35
    %p37 = scmp.eq.s32.totalorder %s36, 0
    %s39 = sadd.s32 %s38, 1
    %s40 = scalar_select %p37, %s38, %s39
    %p43 = pneg %p37
    %p44 = scmp.eq.s32.totalorder %s14, 1
    %p45 = por %p43, %p44
    %p46 = scmp.ne.s32.totalorder %s38, %s41
    %p47 = scmp.eq.s32.totalorder %s14, 0
    %p48 = por %p46, %p47
    %p49 = scmp.ne.s32.totalorder %s38, %s41
    %p50 = scmp.eq.s32.totalorder %s19, 1
    %p51 = por %p49, %p50
    %p52 = scmp.ne.s32.totalorder %s41, %s42
    %p53 = scmp.eq.s32.totalorder %s19, 0
    %p54 = por %p52, %p53
    %p55 = scmp.ne.s32.totalorder %s41, %s42
    %p56 = scmp.eq.s32.totalorder %s20, 1
    %p57 = por %p55, %p56
    %p59 = scmp.ne.s32.totalorder %s42, %s58
    %p60 = scmp.eq.s32.totalorder %s20, 0
    %p61 = por %p59, %p60
    %s63 = sadd.s32 %s62, 1
    %p66 = scmp.eq.s32.totalorder %s14, 1
    %p67 = scmp.ne.s32.totalorder %s62, %s64
    %p68 = scmp.eq.s32.totalorder %s14, 0
    %p69 = por %p67, %p68
    %p70 = scmp.ne.s32.totalorder %s62, %s64
    %p71 = scmp.eq.s32.totalorder %s19, 1
    %p72 = por %p70, %p71
    %p73 = scmp.ne.s32.totalorder %s64, %s65
    %p74 = scmp.eq.s32.totalorder %s19, 0
    %p75 = por %p73, %p74
    %p76 = scmp.ne.s32.totalorder %s64, %s65
    %p77 = scmp.eq.s32.totalorder %s20, 1
    %p78 = por %p76, %p77
    %p80 = scmp.ne.s32.totalorder %s65, %s79
    %p81 = scmp.eq.s32.totalorder %s20, 0
    %p82 = por %p80, %p81
    %s84 = sadd.s32 %s83, 1
    %p87 = scmp.eq.s32.totalorder %s14, 1
    %p88 = scmp.ne.s32.totalorder %s83, %s85
    %p89 = scmp.eq.s32.totalorder %s14, 0
    %p90 = por %p88, %p89
    %p91 = scmp.ne.s32.totalorder %s83, %s85
    %p92 = scmp.eq.s32.totalorder %s19, 1
    %p93 = por %p91, %p92
    %p94 = scmp.ne.s32.totalorder %s85, %s86
    %p95 = scmp.eq.s32.totalorder %s19, 0
    %p96 = por %p94, %p95
    %p97 = scmp.ne.s32.totalorder %s85, %s86
    %p98 = scmp.eq.s32.totalorder %s20, 1
    %p99 = por %p97, %p98
    %p101 = scmp.ne.s32.totalorder %s86, %s100
    %p102 = scmp.eq.s32.totalorder %s20, 0
    %p103 = por %p101, %p102
    %s104 = sadd.s32 %s21, %s22
    %s105 = sadd.s32 %s33, %s29
    %s106 = ssub.s32 %s104, %s105
    %p107 = scmp.eq.s32.totalorder %s106, 0
    %s109 = sadd.s32 %s108, 1
    %s110 = scalar_select %p107, %s108, %s109
    %p113 = pneg %p107
    %p114 = scmp.eq.s32.totalorder %s14, 1
    %p115 = por %p113, %p114
    %p116 = scmp.ne.s32.totalorder %s108, %s111
    %p117 = scmp.eq.s32.totalorder %s14, 0
    %p118 = por %p116, %p117
    %p119 = scmp.ne.s32.totalorder %s108, %s111
    %p120 = scmp.eq.s32.totalorder %s19, 1
    %p121 = por %p119, %p120
    %p122 = scmp.ne.s32.totalorder %s111, %s112
    %p123 = scmp.eq.s32.totalorder %s19, 0
    %p124 = por %p122, %p123
    %p125 = scmp.ne.s32.totalorder %s111, %s112
    %p126 = scmp.eq.s32.totalorder %s20, 1
    %p127 = por %p125, %p126
    %p129 = scmp.ne.s32.totalorder %s112, %s128
    %p130 = scmp.eq.s32.totalorder %s20, 0
    %p131 = por %p129, %p130
    %s132 = sadd.s32 %s21, %s22
    %s133 = sadd.s32 %s33, %s29
    %s134 = ssub.s32 %s132, %s133
    %p135 = scmp.eq.s32.totalorder %s134, 0
    %s137 = sadd.s32 %s136, 1
    %s138 = scalar_select %p135, %s136, %s137
    %p141 = pneg %p135
    %p142 = scmp.eq.s32.totalorder %s14, 1
    %p143 = por %p141, %p142
    %p144 = scmp.ne.s32.totalorder %s136, %s139
    %p145 = scmp.eq.s32.totalorder %s14, 0
    %p146 = por %p144, %p145
    %p147 = scmp.ne.s32.totalorder %s136, %s139
    %p148 = scmp.eq.s32.totalorder %s19, 1
    %p149 = por %p147, %p148
    %p150 = scmp.ne.s32.totalorder %s139, %s140
    %p151 = scmp.eq.s32.totalorder %s19, 0
    %p152 = por %p150, %p151
    %p153 = scmp.ne.s32.totalorder %s139, %s140
    %p154 = scmp.eq.s32.totalorder %s20, 1
    %p155 = por %p153, %p154
    %p157 = scmp.ne.s32.totalorder %s140, %s156
    %p158 = scmp.eq.s32.totalorder %s20, 0
    %p159 = por %p157, %p158
    %s160 = ssub.s32 %s21, %s33
    %p161 = scmp.eq.s32.totalorder %s160, 0
    %s163 = sadd.s32 %s162, 1
    %s164 = scalar_select %p161, %s162, %s163
    %p167 = pneg %p161
    %p168 = scmp.eq.s32.totalorder %s14, 1
    %p169 = por %p167, %p168
    %p170 = scmp.ne.s32.totalorder %s162, %s165
    %p171 = scmp.eq.s32.totalorder %s14, 0
    %p172 = por %p170, %p171
    %p173 = scmp.ne.s32.totalorder %s162, %s165
    %p174 = scmp.eq.s32.totalorder %s19, 1
    %p175 = por %p173, %p174
    %p176 = scmp.ne.s32.totalorder %s165, %s166
    %p177 = scmp.eq.s32.totalorder %s19, 0
    %p178 = por %p176, %p177
    %p179 = scmp.ne.s32.totalorder %s165, %s166
    %p180 = scmp.eq.s32.totalorder %s20, 1
    %p181 = por %p179, %p180
    %p183 = scmp.ne.s32.totalorder %s166, %s182
    %p184 = scmp.eq.s32.totalorder %s20, 0
    %p185 = por %p183, %p184
    %s186 = ssub.s32 %s21, %s33
    %p187 = scmp.eq.s32.totalorder %s186, 0
    %s189 = sadd.s32 %s188, 1
    %s190 = scalar_select %p187, %s188, %s189
    %p193 = pneg %p187
    %p194 = scmp.eq.s32.totalorder %s14, 1
    %p195 = por %p193, %p194
    %p196 = scmp.ne.s32.totalorder %s188, %s191
    %p197 = scmp.eq.s32.totalorder %s14, 0
    %p198 = por %p196, %p197
    %p199 = scmp.ne.s32.totalorder %s188, %s191
    %p200 = scmp.eq.s32.totalorder %s19, 1
    %p201 = por %p199, %p200
    %p202 = scmp.ne.s32.totalorder %s191, %s192
    %p203 = scmp.eq.s32.totalorder %s19, 0
    %p204 = por %p202, %p203
    %p205 = scmp.ne.s32.totalorder %s191, %s192
    %p206 = scmp.eq.s32.totalorder %s20, 1
    %p207 = por %p205, %p206
    %p209 = scmp.ne.s32.totalorder %s192, %s208
    %p210 = scmp.eq.s32.totalorder %s20, 0
    %p211 = por %p209, %p210
    %s212 = ssub.s32 %s21, %s33
    %p213 = scmp.eq.s32.totalorder %s212, 0
    %s215 = sadd.s32 %s214, 1
    %s216 = scalar_select %p213, %s214, %s215
    %p219 = pneg %p213
    %p220 = scmp.eq.s32.totalorder %s14, 1
    %p221 = por %p219, %p220
    %p222 = scmp.ne.s32.totalorder %s214, %s217
    %p223 = scmp.eq.s32.totalorder %s14, 0
    %p224 = por %p222, %p223
    %p225 = scmp.ne.s32.totalorder %s214, %s217
    %p226 = scmp.eq.s32.totalorder %s19, 1
    %p227 = por %p225, %p226
    %p228 = scmp.ne.s32.totalorder %s217, %s218
    %p229 = scmp.eq.s32.totalorder %s19, 0
    %p230 = por %p228, %p229
    %p231 = scmp.ne.s32.totalorder %s217, %s218
    %p232 = scmp.eq.s32.totalorder %s20, 1
    %p233 = por %p231, %p232
    %p235 = scmp.ne.s32.totalorder %s218, %s234
    %p236 = scmp.eq.s32.totalorder %s20, 0
    %p237 = por %p235, %p236
    %p238 = scmp.le.s32.totalorder 1, %s14
    %p239 = scmp.lt.s32.totalorder %s14, 3
    %p240 = pnand %p238, %p239
    %p241 = pneg %p240
    // Predicated region
    $region9: #{vector_quantizer_ema_forward.1} parent=5 // pred_check
      _
    $region10: #{vector_quantizer_ema_forward.1} parent=5 // pred_check_branch
      %243 = sbr.rel (%p240) target = $region12
    $region11: #{vector_quantizer_ema_forward.1} parent=5 // pred_region
      %s244 = ssub.s32 %s14, 1
      // Predicated region
      $region13: #{vector_quantizer_ema_forward.1} parent=11 // pred_check
        %p245 = pneg %p75
      $region14: #{vector_quantizer_ema_forward.1} parent=11 // pred_check_branch
        %247 = sbr.rel (%p245) target = $region16
      $region15: #{vector_quantizer_ema_forward.1} parent=11 // pred_region
        _
      $region16: #{vector_quantizer_ema_forward.1} parent=11 // pred_fallthru
        _
      // Predicated region
      $region17: #{vector_quantizer_ema_forward.1} parent=11 // pred_check
        %p248 = pneg %p96
      $region18: #{vector_quantizer_ema_forward.1} parent=11 // pred_check_branch
        %250 = sbr.rel (%p248) target = $region20
      $region19: #{vector_quantizer_ema_forward.1} parent=11 // pred_region
        _
      $region20: #{vector_quantizer_ema_forward.1} parent=11 // pred_fallthru
        _
    $region12: #{vector_quantizer_ema_forward.1} parent=5 // pred_fallthru
      _
    %p251 = scmp.lt.s32.totalorder %s14, 2
    // Predicated region
    $region21: #{vector_quantizer_ema_forward.1} parent=5 // pred_check
      %p252 = pneg %p251
    $region22: #{vector_quantizer_ema_forward.1} parent=5 // pred_check_branch
      %254 = sbr.rel (%p252) target = $region24
    $region23: #{vector_quantizer_ema_forward.1} parent=5 // pred_region
      // Predicated region
      $region25: #{vector_quantizer_ema_forward.1} parent=23 // pred_check
        %p255 = pneg %p48
      $region26: #{vector_quantizer_ema_forward.1} parent=23 // pred_check_branch
        %257 = sbr.rel (%p255) target = $region28
      $region27: #{vector_quantizer_ema_forward.1} parent=23 // pred_region
        %s258 = sadd.s32 %s21, %s22
        %s259 = smul.u32 10, %s258
        %p260 = scmp.lt.s32.totalorder %s259, 19
        %s261 = scalar_select %p260, %s259, 19
        %s262 = smul.addr %s261, 8
        %s263 = scalar_lea.vmem %s0, %s262
        %s264 = sadd.s32 %s21, %s22
        %s265 = smul.u32 10, %s264
      $region28: #{vector_quantizer_ema_forward.1} parent=23 // pred_fallthru
        _
    $region24: #{vector_quantizer_ema_forward.1} parent=5 // pred_fallthru
      _
    %p266 = scmp.le.s32.totalorder 1, %s14
    %p267 = scmp.lt.s32.totalorder %s14, 3
    %p268 = pnand %p266, %p267
    %p269 = pneg %p268
    // Predicated region
    $region29: #{vector_quantizer_ema_forward.1} parent=5 // pred_check
      _
    $region30: #{vector_quantizer_ema_forward.1} parent=5 // pred_check_branch
      %271 = sbr.rel (%p268) target = $region32
    $region31: #{vector_quantizer_ema_forward.1} parent=5 // pred_region
      %s272 = ssub.s32 %s14, 1
      %s273 = sadd.s32 %s23, %s24
      %s274 = smul.u32 10, %s273
      %p275 = scmp.lt.s32.totalorder %s274, 19
      %s276 = scalar_select %p275, %s274, 19
      %s277 = smul.addr %s276, 8
      %s278 = scalar_lea.vmem %s0, %s277
      %p279 = pneg %p54
      %p280 = pneg %p51
      %p281 = pneg %p75
      %p282 = pneg %p72
      %p283 = pneg %p96
      %p284 = pneg %p93
      %p285 = pneg %p124
      %p286 = pneg %p121
      %s287 = sadd.s32 %s23, %s24
      %s288 = smul.u32 10, %s287
      %p289 = scmp.lt.s32.totalorder %s288, 19
      %s290 = scalar_select %p289, %s288, 19
      %s291 = smul.addr %s290, 8
      %s292 = scalar_lea.vmem %s3, %s291
      %p293 = pneg %p152
      %p294 = pneg %p149
      %s295 = sadd.s32 %s23, %s24
      %s296 = smul.u32 10, %s295
      %p297 = scmp.lt.s32.totalorder %s296, 19
      %s298 = scalar_select %p297, %s296, 19
      %s299 = smul.addr %s298, 8
      %s300 = scalar_lea.vmem %s4, %s299
      %p301 = pneg %p178
      %p302 = pneg %p175
      %p303 = scmp.lt.s32.totalorder %s23, 1
      %s304 = scalar_select %p303, %s23, 1
      %s305 = scalar_lea.vmem %s5, %s304
      %p306 = pneg %p204
      %p307 = pneg %p201
      %p308 = scmp.lt.s32.totalorder %s23, 1
      %s309 = scalar_select %p308, %s23, 1
      %s310 = smul.addr %s309, 16
      %s311 = smul.addr %s310, 8
      %s312 = scalar_lea.vmem %s6, %s311
      %p313 = pneg %p230
      %p314 = pneg %p227
      %p315 = scmp.lt.s32.totalorder %s23, 1
      %s316 = scalar_select %p315, %s23, 1
      %s317 = scalar_lea.vmem %s7, %s316
      %s318 = sadd.s32 %s23, %s24
      %s319 = smul.u32 10, %s318
      %p320 = scmp.lt.s32.totalorder %s319, 19
      %s321 = scalar_select %p320, %s319, 19
      %s322 = smul.addr %s321, 8
      %s323 = scalar_lea.vmem %s0, %s322
      %s324 = sadd.s32 %s23, %s24
      %s325 = smul.u32 10, %s324
      %s326 = sadd.s32 %s23, %s24
      %s327 = smul.u32 10, %s326
      %p328 = scmp.lt.s32.totalorder %s327, 19
      %s329 = scalar_select %p328, %s327, 19
      %s330 = smul.addr %s329, 8
      %s331 = scalar_lea.vmem %s3, %s330
      %s332 = sadd.s32 %s23, %s24
      %s333 = smul.u32 10, %s332
      %s334 = sadd.s32 %s23, %s24
      %s335 = smul.u32 10, %s334
      %p336 = scmp.lt.s32.totalorder %s335, 19
      %s337 = scalar_select %p336, %s335, 19
      %s338 = smul.addr %s337, 8
      %s339 = scalar_lea.vmem %s4, %s338
      %s340 = sadd.s32 %s23, %s24
      %s341 = smul.u32 10, %s340
      %p342 = scmp.lt.s32.totalorder %s23, 1
      %s343 = scalar_select %p342, %s23, 1
      %s344 = scalar_lea.vmem %s5, %s343
      %p345 = scmp.lt.s32.totalorder %s23, 1
      %s346 = scalar_select %p345, %s23, 1
      %s347 = smul.addr %s346, 16
      %s348 = smul.addr %s347, 8
      %s349 = scalar_lea.vmem %s6, %s348
      %p350 = scmp.lt.s32.totalorder %s23, 1
      %s351 = scalar_select %p350, %s23, 1
      %s352 = scalar_lea.vmem %s7, %s351
      %p353 = scmp.eq.s32.totalorder %s24, 0
      // Predicated region
      $region33: #{vector_quantizer_ema_forward.1} parent=31 // pred_check
        %p354 = pneg %p353
      $region34: #{vector_quantizer_ema_forward.1} parent=31 // pred_check_branch
        %356 = sbr.rel (%p354) target = $region36
      $region35: #{vector_quantizer_ema_forward.1} parent=31 // pred_region
        %357 = vst [vmem:[%s344] sm:$0x1] 0.0
        %vm358 = vcmask 261120
        %359 = vst.msk [vmem:[%s349] sm:$0xff] %vm358, 0.0
        %360 = vst.msk [vmem:[%s349 + $0x8] sm:$0xff] %vm358, 0.0
        %361 = vst.msk [vmem:[%s349 + $0x10] sm:$0xff] %vm358, 0.0
        %362 = vst.msk [vmem:[%s349 + $0x18] sm:$0xff] %vm358, 0.0
        %363 = vst.msk [vmem:[%s349 + $0x20] sm:$0xff] %vm358, 0.0
        %364 = vst.msk [vmem:[%s349 + $0x28] sm:$0xff] %vm358, 0.0
        %365 = vst.msk [vmem:[%s349 + $0x30] sm:$0xff] %vm358, 0.0
        %366 = vst.msk [vmem:[%s349 + $0x38] sm:$0xff] %vm358, 0.0
        %367 = vst.msk [vmem:[%s349 + $0x40] sm:$0xff] %vm358, 0.0
        %368 = vst.msk [vmem:[%s349 + $0x48] sm:$0xff] %vm358, 0.0
        %369 = vst.msk [vmem:[%s349 + $0x50] sm:$0xff] %vm358, 0.0
        %370 = vst.msk [vmem:[%s349 + $0x58] sm:$0xff] %vm358, 0.0
        %371 = vst.msk [vmem:[%s349 + $0x60] sm:$0xff] %vm358, 0.0
        %372 = vst.msk [vmem:[%s349 + $0x68] sm:$0xff] %vm358, 0.0
        %373 = vst.msk [vmem:[%s349 + $0x70] sm:$0xff] %vm358, 0.0
        %374 = vst.msk [vmem:[%s349 + $0x78] sm:$0xff] %vm358, 0.0
        %vm375 = vcmask 0
        %376 = vst.msk [vmem:[%s352] sm:$0x1] %vm375, 0.0
      $region36: #{vector_quantizer_ema_forward.1} parent=31 // pred_fallthru
        _
      %v377 = vld [vmem:[%s323] sm:$0xff]
      %v378 = vld [vmem:[%s323 + $0x8] sm:$0xff]
      %v379 = vld [vmem:[%s323 + $0x10] sm:$0xff]
      %v380 = vld [vmem:[%s323 + $0x18] sm:$0xff]
      %v381 = vld [vmem:[%s323 + $0x20] sm:$0xff]
      %v382 = vld [vmem:[%s323 + $0x28] sm:$0xff]
      %v383 = vld [vmem:[%s323 + $0x30] sm:$0xff]
      %v384 = vld [vmem:[%s323 + $0x38] sm:$0xff]
      %v385 = vld [vmem:[%s323 + $0x40] sm:$0xff]
      %v386 = vld [vmem:[%s323 + $0x48] sm:$0xff]
      %v387 = vld [vmem:[%s1] sm:$0xff]
      %v388 = vld [vmem:[%s1 + $0x8] sm:$0xff]
      %v389 = vld [vmem:[%s1 + $0x10] sm:$0xff]
      %v390 = vld [vmem:[%s1 + $0x18] sm:$0xff]
      %v391 = vld [vmem:[%s1 + $0x20] sm:$0xff]
      %v392 = vld [vmem:[%s1 + $0x28] sm:$0xff]
      %v393 = vld [vmem:[%s1 + $0x30] sm:$0xff]
      %v394 = vld [vmem:[%s1 + $0x38] sm:$0xff]
      %v395 = vld [vmem:[%s1 + $0x40] sm:$0xff]
      %v396 = vld [vmem:[%s1 + $0x48] sm:$0xff]
      %v397 = vld [vmem:[%s1 + $0x50] sm:$0xff]
      %v398 = vld [vmem:[%s1 + $0x58] sm:$0xff]
      %v399 = vld [vmem:[%s1 + $0x60] sm:$0xff]
      %v400 = vld [vmem:[%s1 + $0x68] sm:$0xff]
      %v401 = vld [vmem:[%s1 + $0x70] sm:$0xff]
      %v402 = vld [vmem:[%s1 + $0x78] sm:$0xff]
      %v403 = vld [vmem:[%s2] sm:$0x1]
      %vm404 = vcmask 261120
      %v406 = vsel %vm404, %v377, 0
      %v409 = vsel %vm404, %v378, 0
      %v412 = vsel %vm404, %v379, 0
      %v415 = vsel %vm404, %v380, 0
      %v418 = vsel %vm404, %v381, 0
      %v421 = vsel %vm404, %v382, 0
      %v424 = vsel %vm404, %v383, 0
      %v427 = vsel %vm404, %v384, 0
      %v430 = vsel %vm404, %v385, 0
      %v433 = vsel %vm404, %v386, 0
      %v436 = vsel %vm404, %v387, 0
      %v439 = vsel %vm404, %v388, 0
      %v442 = vsel %vm404, %v389, 0
      %v445 = vsel %vm404, %v390, 0
      %v448 = vsel %vm404, %v391, 0
      %v451 = vsel %vm404, %v392, 0
      %v454 = vsel %vm404, %v393, 0
      %v457 = vsel %vm404, %v394, 0
      %v460 = vsel %vm404, %v395, 0
      %v463 = vsel %vm404, %v396, 0
      %v466 = vsel %vm404, %v397, 0
      %v469 = vsel %vm404, %v398, 0
      %v472 = vsel %vm404, %v399, 0
      %v475 = vsel %vm404, %v400, 0
      %v478 = vsel %vm404, %v401, 0
      %v481 = vsel %vm404, %v402, 0
      %483 = vmatprep.subr.mxu0 0.0
      %484 = vmatpush1.xpose.msra.mxu0 %v436
      %485 = vmatprep.subr.mxu0 0.0
      %486 = vmatpush1.xpose.msra.mxu0 %v439
      %487 = vmatprep.subr.mxu0 0.0
      %488 = vmatpush1.xpose.msra.mxu0 %v442
      %489 = vmatprep.subr.mxu0 0.0
      %490 = vmatpush1.xpose.msra.mxu0 %v445
      %491 = vmatprep.subr.mxu0 0.0
      %492 = vmatpush1.xpose.msra.mxu0 %v448
      %493 = vmatprep.subr.mxu0 0.0
      %494 = vmatpush1.xpose.msra.mxu0 %v451
      %495 = vmatprep.subr.mxu0 0.0
      %496 = vmatpush1.xpose.msra.mxu0 %v454
      %497 = vmatprep.subr.mxu0 0.0
      %498 = vmatpush1.xpose.msra.mxu0 %v457
      %499 = vmatprep.subr.mxu0 0.0
      %500 = vmatpush1.xpose.msra.mxu0 %v460
      %501 = vmatprep.subr.mxu0 0.0
      %502 = vmatpush1.xpose.msra.mxu0 %v463
      %503 = vmatprep.subr.mxu0 0.0
      %504 = vmatpush1.xpose.msra.mxu0 %v466
      %505 = vmatprep.subr.mxu0 0.0
      %506 = vmatpush1.xpose.msra.mxu0 %v469
      %507 = vmatprep.subr.mxu0 0.0
      %508 = vmatpush1.xpose.msra.mxu0 %v472
      %509 = vmatprep.subr.mxu0 0.0
      %510 = vmatpush1.xpose.msra.mxu0 %v475
      %511 = vmatprep.subr.mxu0 0.0
      %512 = vmatpush1.xpose.msra.mxu0 %v478
      %513 = vmatprep.subr.mxu0 0.0
      %514 = vmatpush1.xpose.msra.mxu0 %v481
      %515 = vmatprep.subr.mxu0 0.0
      %516 = vmatpush1.xpose.msra.mxu0 0.0
      %517 = vmatprep.subr.mxu0 0.0
      %518 = vmatpush1.xpose.msra.mxu0 0.0
      %519 = vmatprep.subr.mxu0 0.0
      %520 = vmatpush1.xpose.msra.mxu0 0.0
      %521 = vmatprep.subr.mxu0 0.0
      %522 = vmatpush1.xpose.msra.mxu0 0.0
      %523 = vmatprep.subr.mxu0 0.0
      %524 = vmatpush1.xpose.msra.mxu0 0.0
      %525 = vmatprep.subr.mxu0 0.0
      %526 = vmatpush1.xpose.msra.mxu0 0.0
      %527 = vmatprep.subr.mxu0 0.0
      %528 = vmatpush1.xpose.msra.mxu0 0.0
      %529 = vmatprep.subr.mxu0 0.0
      %530 = vmatpush1.xpose.msra.mxu0 0.0
      %531 = vmatprep.subr.mxu0 0.0
      %532 = vmatpush1.xpose.msra.mxu0 0.0
      %533 = vmatprep.subr.mxu0 0.0
      %534 = vmatpush1.xpose.msra.mxu0 0.0
      %535 = vmatprep.subr.mxu0 0.0
      %536 = vmatpush1.xpose.msra.mxu0 0.0
      %537 = vmatprep.subr.mxu0 0.0
      %538 = vmatpush1.xpose.msra.mxu0 0.0
      %539 = vmatprep.subr.mxu0 0.0
      %540 = vmatpush1.xpose.msra.mxu0 0.0
      %541 = vmatprep.subr.mxu0 0.0
      %542 = vmatpush1.xpose.msra.mxu0 0.0
      %543 = vmatprep.subr.mxu0 0.0
      %544 = vmatpush1.xpose.msra.mxu0 0.0
      %545 = vmatprep.subr.mxu0 0.0
      %546 = vmatpush1.xpose.msra.mxu0 0.0
      %547 = vmatprep.mubr.f32.mxu0 0.0
      %548 = vmatmul.mubr.f32.gmra.mrb[0].mxu0 %v406
      %v549 = vpop.f32.mrb[0].mxu0
      %v550 = vadd.f32 0.0, %v549
      %v551 = vpop.f32.mrb[0].mxu0
      %552 = vmatprep.mubr.f32.mxu0 0.0
      %553 = vmatmul.mubr.f32.gmra.mrb[0].mxu0 %v409
      %v554 = vpop.f32.mrb[0].mxu0
      %v555 = vadd.f32 0.0, %v554
      %v556 = vpop.f32.mrb[0].mxu0
      %557 = vmatprep.mubr.f32.mxu0 0.0
      %558 = vmatmul.mubr.f32.gmra.mrb[0].mxu0 %v412
      %v559 = vpop.f32.mrb[0].mxu0
      %v560 = vadd.f32 0.0, %v559
      %v561 = vpop.f32.mrb[0].mxu0
      %562 = vmatprep.mubr.f32.mxu0 0.0
      %563 = vmatmul.mubr.f32.gmra.mrb[0].mxu0 %v415
      %v564 = vpop.f32.mrb[0].mxu0
      %v565 = vadd.f32 0.0, %v564
      %v566 = vpop.f32.mrb[0].mxu0
      %567 = vmatprep.mubr.f32.mxu0 0.0
      %568 = vmatmul.mubr.f32.gmra.mrb[0].mxu0 %v418
      %v569 = vpop.f32.mrb[0].mxu0
      %v570 = vadd.f32 0.0, %v569
      %v571 = vpop.f32.mrb[0].mxu0
      %572 = vmatprep.mubr.f32.mxu0 0.0
      %573 = vmatmul.mubr.f32.gmra.mrb[0].mxu0 %v421
      %v574 = vpop.f32.mrb[0].mxu0
      %v575 = vadd.f32 0.0, %v574
      %v576 = vpop.f32.mrb[0].mxu0
      %577 = vmatprep.mubr.f32.mxu0 0.0
      %578 = vmatmul.mubr.f32.gmra.mrb[0].mxu0 %v424
      %v579 = vpop.f32.mrb[0].mxu0
      %v580 = vadd.f32 0.0, %v579
      %v581 = vpop.f32.mrb[0].mxu0
      %582 = vmatprep.mubr.f32.mxu0 0.0
      %583 = vmatmul.mubr.f32.gmra.mrb[0].mxu0 %v427
      %v584 = vpop.f32.mrb[0].mxu0
      %v585 = vadd.f32 0.0, %v584
      %v586 = vpop.f32.mrb[0].mxu0
      %587 = vmatprep.mubr.f32.mxu0 0.0
      %588 = vmatmul.mubr.f32.gmra.mrb[0].mxu0 %v430
      %v589 = vpop.f32.mrb[0].mxu0
      %v590 = vadd.f32 0.0, %v589
      %v591 = vpop.f32.mrb[0].mxu0
      %592 = vmatprep.mubr.f32.mxu0 0.0
      %593 = vmatmul.mubr.f32.gmra.mrb[0].mxu0 %v433
      %v594 = vpop.f32.mrb[0].mxu0
      %v595 = vadd.f32 0.0, %v594
      %v596 = vpop.f32.mrb[0].mxu0
      %597 = vdwg.mxu0
      %v599 = vlaneseq
      %v600 = vshrl.u32 %v599, 7
      %v601 = vsub.s32 0, %v600
      %v602 = vrot.slane %v403, %v601
      %v604 = vsub.f32 %v602, %v550
      %v605 = vsub.f32 %v602, %v555
      %v606 = vsub.f32 %v602, %v560
      %v607 = vsub.f32 %v602, %v565
      %v608 = vsub.f32 %v602, %v570
      %v609 = vsub.f32 %v602, %v575
      %v610 = vsub.f32 %v602, %v580
      %v611 = vsub.f32 %v602, %v585
      %v612 = vsub.f32 %v602, %v590
      %v613 = vsub.f32 %v602, %v595
      %v614 = vlaneseq
      %v615 = vand.u32 %v614, 127
      %616 = vmin.xlane.f32.xlu0 %v604
      %v617 = vpop.xlane.xlu0 %616
      %618 = vmin.xlane.f32.xlu0 %v605
      %v619 = vpop.xlane.xlu0 %618
      %620 = vmin.xlane.f32.xlu0 %v606
      %v621 = vpop.xlane.xlu0 %620
      %622 = vmin.xlane.f32.xlu0 %v607
      %v623 = vpop.xlane.xlu0 %622
      %624 = vmin.xlane.f32.xlu0 %v608
      %v625 = vpop.xlane.xlu0 %624
      %626 = vmin.xlane.f32.xlu0 %v609
      %v627 = vpop.xlane.xlu0 %626
      %628 = vmin.xlane.f32.xlu0 %v610
      %v629 = vpop.xlane.xlu0 %628
      %630 = vmin.xlane.f32.xlu0 %v611
      %v631 = vpop.xlane.xlu0 %630
      %632 = vmin.xlane.f32.xlu0 %v612
      %v633 = vpop.xlane.xlu0 %632
      %634 = vmin.xlane.f32.xlu0 %v613
      %v635 = vpop.xlane.xlu0 %634
      %vm636 = vcmp.eq.f32.partialorder %v604, %v617
      %vm637 = vcmp.eq.f32.partialorder %v605, %v619
      %vm638 = vcmp.eq.f32.partialorder %v606, %v621
      %vm639 = vcmp.eq.f32.partialorder %v607, %v623
      %vm640 = vcmp.eq.f32.partialorder %v608, %v625
      %vm641 = vcmp.eq.f32.partialorder %v609, %v627
      %vm642 = vcmp.eq.f32.partialorder %v610, %v629
      %vm643 = vcmp.eq.f32.partialorder %v611, %v631
      %vm644 = vcmp.eq.f32.partialorder %v612, %v633
      %vm645 = vcmp.eq.f32.partialorder %v613, %v635
      %v646 = vsel %vm636, %v615, 128
      %v647 = vsel %vm637, %v615, 128
      %v648 = vsel %vm638, %v615, 128
      %v649 = vsel %vm639, %v615, 128
      %v650 = vsel %vm640, %v615, 128
      %v651 = vsel %vm641, %v615, 128
      %v652 = vsel %vm642, %v615, 128
      %v653 = vsel %vm643, %v615, 128
      %v654 = vsel %vm644, %v615, 128
      %v655 = vsel %vm645, %v615, 128
      %v656 = vand.u32 %v646, 65535
      %v657 = vshra.s32 %v646, 16
      %v658 = vcvt.s32.f32 %v656
      %v659 = vcvt.s32.f32 %v657
      %660 = vmin.xlane.f32.xlu0 %v659
      %v661 = vpop.xlane.xlu0 %660
      %vm662 = vcmp.eq.f32.partialorder %v659, %v661
      %v663 = vsel %vm662, %v658, inf
      %664 = vmin.xlane.f32.xlu0 %v663
      %v665 = vpop.xlane.xlu0 %664
      %v666 = vcvt.f32.s32 %v665
      %v667 = vcvt.f32.s32 %v661
      %v668 = vshll.u32 %v667, 16
      %v669 = vadd.s32 %v668, %v666
      %v670 = vand.u32 %v647, 65535
      %v671 = vshra.s32 %v647, 16
      %v672 = vcvt.s32.f32 %v670
      %v673 = vcvt.s32.f32 %v671
      %674 = vmin.xlane.f32.xlu0 %v673
      %v675 = vpop.xlane.xlu0 %674
      %vm676 = vcmp.eq.f32.partialorder %v673, %v675
      %v677 = vsel %vm676, %v672, inf
      %678 = vmin.xlane.f32.xlu0 %v677
      %v679 = vpop.xlane.xlu0 %678
      %v680 = vcvt.f32.s32 %v679
      %v681 = vcvt.f32.s32 %v675
      %v682 = vshll.u32 %v681, 16
      %v683 = vadd.s32 %v682, %v680
      %v684 = vand.u32 %v648, 65535
      %v685 = vshra.s32 %v648, 16
      %v686 = vcvt.s32.f32 %v684
      %v687 = vcvt.s32.f32 %v685
      %688 = vmin.xlane.f32.xlu0 %v687
      %v689 = vpop.xlane.xlu0 %688
      %vm690 = vcmp.eq.f32.partialorder %v687, %v689
      %v691 = vsel %vm690, %v686, inf
      %692 = vmin.xlane.f32.xlu0 %v691
      %v693 = vpop.xlane.xlu0 %692
      %v694 = vcvt.f32.s32 %v693
      %v695 = vcvt.f32.s32 %v689
      %v696 = vshll.u32 %v695, 16
      %v697 = vadd.s32 %v696, %v694
      %v698 = vand.u32 %v649, 65535
      %v699 = vshra.s32 %v649, 16
      %v700 = vcvt.s32.f32 %v698
      %v701 = vcvt.s32.f32 %v699
      %702 = vmin.xlane.f32.xlu0 %v701
      %v703 = vpop.xlane.xlu0 %702
      %vm704 = vcmp.eq.f32.partialorder %v701, %v703
      %v705 = vsel %vm704, %v700, inf
      %706 = vmin.xlane.f32.xlu0 %v705
      %v707 = vpop.xlane.xlu0 %706
      %v708 = vcvt.f32.s32 %v707
      %v709 = vcvt.f32.s32 %v703
      %v710 = vshll.u32 %v709, 16
      %v711 = vadd.s32 %v710, %v708
      %v712 = vand.u32 %v650, 65535
      %v713 = vshra.s32 %v650, 16
      %v714 = vcvt.s32.f32 %v712
      %v715 = vcvt.s32.f32 %v713
      %716 = vmin.xlane.f32.xlu0 %v715
      %v717 = vpop.xlane.xlu0 %716
      %vm718 = vcmp.eq.f32.partialorder %v715, %v717
      %v719 = vsel %vm718, %v714, inf
      %720 = vmin.xlane.f32.xlu0 %v719
      %v721 = vpop.xlane.xlu0 %720
      %v722 = vcvt.f32.s32 %v721
      %v723 = vcvt.f32.s32 %v717
      %v724 = vshll.u32 %v723, 16
      %v725 = vadd.s32 %v724, %v722
      %v726 = vand.u32 %v651, 65535
      %v727 = vshra.s32 %v651, 16
      %v728 = vcvt.s32.f32 %v726
      %v729 = vcvt.s32.f32 %v727
      %730 = vmin.xlane.f32.xlu0 %v729
      %v731 = vpop.xlane.xlu0 %730
      %vm732 = vcmp.eq.f32.partialorder %v729, %v731
      %v733 = vsel %vm732, %v728, inf
      %734 = vmin.xlane.f32.xlu0 %v733
      %v735 = vpop.xlane.xlu0 %734
      %v736 = vcvt.f32.s32 %v735
      %v737 = vcvt.f32.s32 %v731
      %v738 = vshll.u32 %v737, 16
      %v739 = vadd.s32 %v738, %v736
      %v740 = vand.u32 %v652, 65535
      %v741 = vshra.s32 %v652, 16
      %v742 = vcvt.s32.f32 %v740
      %v743 = vcvt.s32.f32 %v741
      %744 = vmin.xlane.f32.xlu0 %v743
      %v745 = vpop.xlane.xlu0 %744
      %vm746 = vcmp.eq.f32.partialorder %v743, %v745
      %v747 = vsel %vm746, %v742, inf
      %748 = vmin.xlane.f32.xlu0 %v747
      %v749 = vpop.xlane.xlu0 %748
      %v750 = vcvt.f32.s32 %v749
      %v751 = vcvt.f32.s32 %v745
      %v752 = vshll.u32 %v751, 16
      %v753 = vadd.s32 %v752, %v750
      %v754 = vand.u32 %v653, 65535
      %v755 = vshra.s32 %v653, 16
      %v756 = vcvt.s32.f32 %v754
      %v757 = vcvt.s32.f32 %v755
      %758 = vmin.xlane.f32.xlu0 %v757
      %v759 = vpop.xlane.xlu0 %758
      %vm760 = vcmp.eq.f32.partialorder %v757, %v759
      %v761 = vsel %vm760, %v756, inf
      %762 = vmin.xlane.f32.xlu0 %v761
      %v763 = vpop.xlane.xlu0 %762
      %v764 = vcvt.f32.s32 %v763
      %v765 = vcvt.f32.s32 %v759
      %v766 = vshll.u32 %v765, 16
      %v767 = vadd.s32 %v766, %v764
      %v768 = vand.u32 %v654, 65535
      %v769 = vshra.s32 %v654, 16
      %v770 = vcvt.s32.f32 %v768
      %v771 = vcvt.s32.f32 %v769
      %772 = vmin.xlane.f32.xlu0 %v771
      %v773 = vpop.xlane.xlu0 %772
      %vm774 = vcmp.eq.f32.partialorder %v771, %v773
      %v775 = vsel %vm774, %v770, inf
      %776 = vmin.xlane.f32.xlu0 %v775
      %v777 = vpop.xlane.xlu0 %776
      %v778 = vcvt.f32.s32 %v777
      %v779 = vcvt.f32.s32 %v773
      %v780 = vshll.u32 %v779, 16
      %v781 = vadd.s32 %v780, %v778
      %v782 = vand.u32 %v655, 65535
      %v783 = vshra.s32 %v655, 16
      %v784 = vcvt.s32.f32 %v782
      %v785 = vcvt.s32.f32 %v783
      %786 = vmin.xlane.f32.xlu0 %v785
      %v787 = vpop.xlane.xlu0 %786
      %vm788 = vcmp.eq.f32.partialorder %v785, %v787
      %v789 = vsel %vm788, %v784, inf
      %790 = vmin.xlane.f32.xlu0 %v789
      %v791 = vpop.xlane.xlu0 %790
      %v792 = vcvt.f32.s32 %v791
      %v793 = vcvt.f32.s32 %v787
      %v794 = vshll.u32 %v793, 16
      %v795 = vadd.s32 %v794, %v792
      %vm796 = vcmp.eq.s32.totalorder %v615, %v669
      %vm797 = vcmp.eq.s32.totalorder %v615, %v683
      %vm798 = vcmp.eq.s32.totalorder %v615, %v697
      %vm799 = vcmp.eq.s32.totalorder %v615, %v711
      %vm800 = vcmp.eq.s32.totalorder %v615, %v725
      %vm801 = vcmp.eq.s32.totalorder %v615, %v739
      %vm802 = vcmp.eq.s32.totalorder %v615, %v753
      %vm803 = vcmp.eq.s32.totalorder %v615, %v767
      %vm804 = vcmp.eq.s32.totalorder %v615, %v781
      %vm805 = vcmp.eq.s32.totalorder %v615, %v795
      %v806 = vsel %vm796, 1.0, 0.0
      %v807 = vsel %vm797, 1.0, 0.0
      %v808 = vsel %vm798, 1.0, 0.0
      %v809 = vsel %vm799, 1.0, 0.0
      %v810 = vsel %vm800, 1.0, 0.0
      %v811 = vsel %vm801, 1.0, 0.0
      %v812 = vsel %vm802, 1.0, 0.0
      %v813 = vsel %vm803, 1.0, 0.0
      %v814 = vsel %vm804, 1.0, 0.0
      %v815 = vsel %vm805, 1.0, 0.0
      %816 = vmatprep.subr.mxu0 0.0
      %817 = vmatpush1.msra.mxu0 %v387
      %818 = vmatprep.subr.mxu0 0.0
      %819 = vmatpush1.msra.mxu0 %v388
      %820 = vmatprep.subr.mxu0 0.0
      %821 = vmatpush1.msra.mxu0 %v389
      %822 = vmatprep.subr.mxu0 0.0
      %823 = vmatpush1.msra.mxu0 %v390
      %824 = vmatprep.subr.mxu0 0.0
      %825 = vmatpush1.msra.mxu0 %v391
      %826 = vmatprep.subr.mxu0 0.0
      %827 = vmatpush1.msra.mxu0 %v392
      %828 = vmatprep.subr.mxu0 0.0
      %829 = vmatpush1.msra.mxu0 %v393
      %830 = vmatprep.subr.mxu0 0.0
      %831 = vmatpush1.msra.mxu0 %v394
      %832 = vmatprep.subr.mxu0 0.0
      %833 = vmatpush1.msra.mxu0 %v395
      %834 = vmatprep.subr.mxu0 0.0
      %835 = vmatpush1.msra.mxu0 %v396
      %836 = vmatprep.subr.mxu0 0.0
      %837 = vmatpush1.msra.mxu0 %v397
      %838 = vmatprep.subr.mxu0 0.0
      %839 = vmatpush1.msra.mxu0 %v398
      %840 = vmatprep.subr.mxu0 0.0
      %841 = vmatpush1.msra.mxu0 %v399
      %842 = vmatprep.subr.mxu0 0.0
      %843 = vmatpush1.msra.mxu0 %v400
      %844 = vmatprep.subr.mxu0 0.0
      %845 = vmatpush1.msra.mxu0 %v401
      %846 = vmatprep.subr.mxu0 0.0
      %847 = vmatpush1.msra.mxu0 %v402
      %848 = vmatprep.subr.mxu0 0.0
      %849 = vmatpush1.msra.mxu0 0.0
      %850 = vmatprep.subr.mxu0 0.0
      %851 = vmatpush1.msra.mxu0 0.0
      %852 = vmatprep.subr.mxu0 0.0
      %853 = vmatpush1.msra.mxu0 0.0
      %854 = vmatprep.subr.mxu0 0.0
      %855 = vmatpush1.msra.mxu0 0.0
      %856 = vmatprep.subr.mxu0 0.0
      %857 = vmatpush1.msra.mxu0 0.0
      %858 = vmatprep.subr.mxu0 0.0
      %859 = vmatpush1.msra.mxu0 0.0
      %860 = vmatprep.subr.mxu0 0.0
      %861 = vmatpush1.msra.mxu0 0.0
      %862 = vmatprep.subr.mxu0 0.0
      %863 = vmatpush1.msra.mxu0 0.0
      %864 = vmatprep.subr.mxu0 0.0
      %865 = vmatpush1.msra.mxu0 0.0
      %866 = vmatprep.subr.mxu0 0.0
      %867 = vmatpush1.msra.mxu0 0.0
      %868 = vmatprep.subr.mxu0 0.0
      %869 = vmatpush1.msra.mxu0 0.0
      %870 = vmatprep.subr.mxu0 0.0
      %871 = vmatpush1.msra.mxu0 0.0
      %872 = vmatprep.subr.mxu0 0.0
      %873 = vmatpush1.msra.mxu0 0.0
      %874 = vmatprep.subr.mxu0 0.0
      %875 = vmatpush1.msra.mxu0 0.0
      %876 = vmatprep.subr.mxu0 0.0
      %877 = vmatpush1.msra.mxu0 0.0
      %878 = vmatprep.subr.mxu0 0.0
      %879 = vmatpush1.msra.mxu0 0.0
      %880 = vmatprep.mubr.f32.mxu0 0.0
      %881 = vmatmul.mubr.f32.gmra.mrb[0].mxu0 %v806
      %v882 = vpop.f32.mrb[0].mxu0
      %v883 = vadd.f32 0.0, %v882
      %v884 = vpop.f32.mrb[0].mxu0
      %885 = vmatprep.mubr.f32.mxu0 0.0
      %886 = vmatmul.mubr.f32.gmra.mrb[0].mxu0 %v807
      %v887 = vpop.f32.mrb[0].mxu0
      %v888 = vadd.f32 0.0, %v887
      %v889 = vpop.f32.mrb[0].mxu0
      %890 = vmatprep.mubr.f32.mxu0 0.0
      %891 = vmatmul.mubr.f32.gmra.mrb[0].mxu0 %v808
      %v892 = vpop.f32.mrb[0].mxu0
      %v893 = vadd.f32 0.0, %v892
      %v894 = vpop.f32.mrb[0].mxu0
      %895 = vmatprep.mubr.f32.mxu0 0.0
      %896 = vmatmul.mubr.f32.gmra.mrb[0].mxu0 %v809
      %v897 = vpop.f32.mrb[0].mxu0
      %v898 = vadd.f32 0.0, %v897
      %v899 = vpop.f32.mrb[0].mxu0
      %900 = vmatprep.mubr.f32.mxu0 0.0
      %901 = vmatmul.mubr.f32.gmra.mrb[0].mxu0 %v810
      %v902 = vpop.f32.mrb[0].mxu0
      %v903 = vadd.f32 0.0, %v902
      %v904 = vpop.f32.mrb[0].mxu0
      %905 = vmatprep.mubr.f32.mxu0 0.0
      %906 = vmatmul.mubr.f32.gmra.mrb[0].mxu0 %v811
      %v907 = vpop.f32.mrb[0].mxu0
      %v908 = vadd.f32 0.0, %v907
      %v909 = vpop.f32.mrb[0].mxu0
      %910 = vmatprep.mubr.f32.mxu0 0.0
      %911 = vmatmul.mubr.f32.gmra.mrb[0].mxu0 %v812
      %v912 = vpop.f32.mrb[0].mxu0
      %v913 = vadd.f32 0.0, %v912
      %v914 = vpop.f32.mrb[0].mxu0
      %915 = vmatprep.mubr.f32.mxu0 0.0
      %916 = vmatmul.mubr.f32.gmra.mrb[0].mxu0 %v813
      %v917 = vpop.f32.mrb[0].mxu0
      %v918 = vadd.f32 0.0, %v917
      %v919 = vpop.f32.mrb[0].mxu0
      %920 = vmatprep.mubr.f32.mxu0 0.0
      %921 = vmatmul.mubr.f32.gmra.mrb[0].mxu0 %v814
      %v922 = vpop.f32.mrb[0].mxu0
      %v923 = vadd.f32 0.0, %v922
      %v924 = vpop.f32.mrb[0].mxu0
      %925 = vmatprep.mubr.f32.mxu0 0.0
      %926 = vmatmul.mubr.f32.gmra.mrb[0].mxu0 %v815
      %v927 = vpop.f32.mrb[0].mxu0
      %v928 = vadd.f32 0.0, %v927
      %v929 = vpop.f32.mrb[0].mxu0
      %930 = vdwg.mxu0
      %vm931 = vcmask 7168
      %932 = vst.msk [vmem:[%s331] sm:$0xff] %vm931, %v669
      %933 = vst.msk [vmem:[%s331 + $0x8] sm:$0xff] %vm931, %v683
      %934 = vst.msk [vmem:[%s331 + $0x10] sm:$0xff] %vm931, %v697
      %935 = vst.msk [vmem:[%s331 + $0x18] sm:$0xff] %vm931, %v711
      %936 = vst.msk [vmem:[%s331 + $0x20] sm:$0xff] %vm931, %v725
      %937 = vst.msk [vmem:[%s331 + $0x28] sm:$0xff] %vm931, %v739
      %938 = vst.msk [vmem:[%s331 + $0x30] sm:$0xff] %vm931, %v753
      %939 = vst.msk [vmem:[%s331 + $0x38] sm:$0xff] %vm931, %v767
      %940 = vst.msk [vmem:[%s331 + $0x40] sm:$0xff] %vm931, %v781
      %941 = vst.msk [vmem:[%s331 + $0x48] sm:$0xff] %vm931, %v795
      %942 = vst.msk [vmem:[%s339] sm:$0xff] %vm404, %v883
      %943 = vst.msk [vmem:[%s339 + $0x8] sm:$0xff] %vm404, %v888
      %944 = vst.msk [vmem:[%s339 + $0x10] sm:$0xff] %vm404, %v893
      %945 = vst.msk [vmem:[%s339 + $0x18] sm:$0xff] %vm404, %v898
      %946 = vst.msk [vmem:[%s339 + $0x20] sm:$0xff] %vm404, %v903
      %947 = vst.msk [vmem:[%s339 + $0x28] sm:$0xff] %vm404, %v908
      %948 = vst.msk [vmem:[%s339 + $0x30] sm:$0xff] %vm404, %v913
      %949 = vst.msk [vmem:[%s339 + $0x38] sm:$0xff] %vm404, %v918
      %950 = vst.msk [vmem:[%s339 + $0x40] sm:$0xff] %vm404, %v923
      %951 = vst.msk [vmem:[%s339 + $0x48] sm:$0xff] %vm404, %v928
      %v952 = vld [vmem:[%s349] sm:$0xff]
      %v953 = vld [vmem:[%s349 + $0x8] sm:$0xff]
      %v954 = vld [vmem:[%s349 + $0x10] sm:$0xff]
      %v955 = vld [vmem:[%s349 + $0x18] sm:$0xff]
      %v956 = vld [vmem:[%s349 + $0x20] sm:$0xff]
      %v957 = vld [vmem:[%s349 + $0x28] sm:$0xff]
      %v958 = vld [vmem:[%s349 + $0x30] sm:$0xff]
      %v959 = vld [vmem:[%s349 + $0x38] sm:$0xff]
      %v960 = vld [vmem:[%s349 + $0x40] sm:$0xff]
      %v961 = vld [vmem:[%s349 + $0x48] sm:$0xff]
      %v962 = vld [vmem:[%s349 + $0x50] sm:$0xff]
      %v963 = vld [vmem:[%s349 + $0x58] sm:$0xff]
      %v964 = vld [vmem:[%s349 + $0x60] sm:$0xff]
      %v965 = vld [vmem:[%s349 + $0x68] sm:$0xff]
      %v966 = vld [vmem:[%s349 + $0x70] sm:$0xff]
      %v967 = vld [vmem:[%s349 + $0x78] sm:$0xff]
      %968 = vxpose.xlu0.b32.start [1/16] %v806, 128
      %969 = vxpose.xlu0.b32.cont [2/16] %v807, 128
      %970 = vxpose.xlu0.b32.cont [3/16] %v808, 128
      %971 = vxpose.xlu0.b32.cont [4/16] %v809, 128
      %972 = vxpose.xlu0.b32.cont [5/16] %v810, 128
      %973 = vxpose.xlu0.b32.cont [6/16] %v811, 128
      %974 = vxpose.xlu0.b32.cont [7/16] %v812, 128
      %975 = vxpose.xlu0.b32.cont [8/16] %v813, 128
      %976 = vxpose.xlu0.b32.cont [9/16] %v814, 128
      %977 = vxpose.xlu0.b32.cont [10/16] %v815, 128
      %978 = vxpose.xlu0.b32.cont [11/16] 0.0, 128
      %979 = vxpose.xlu0.b32.cont [12/16] 0.0, 128
      %980 = vxpose.xlu0.b32.cont [13/16] 0.0, 128
      %981 = vxpose.xlu0.b32.cont [14/16] 0.0, 128
      %982 = vxpose.xlu0.b32.cont [15/16] 0.0, 128
      %983 = vxpose.xlu0.b32.end [16/16] 0.0, 128
      %v984 = vpop.trf.xlu0
      %v985 = vpop.trf.xlu0
      %v986 = vpop.trf.xlu0
      %v987 = vpop.trf.xlu0
      %v988 = vpop.trf.xlu0
      %v989 = vpop.trf.xlu0
      %v990 = vpop.trf.xlu0
      %v991 = vpop.trf.xlu0
      %v992 = vpop.trf.xlu0
      %v993 = vpop.trf.xlu0
      %v994 = vpop.trf.xlu0
      %v995 = vpop.trf.xlu0
      %v996 = vpop.trf.xlu0
      %v997 = vpop.trf.xlu0
      %v998 = vpop.trf.xlu0
      %v999 = vpop.trf.xlu0
      %vm1000 = vcmask 654336
      %v1002 = vsel %vm1000, %v984, 0
      %v1005 = vsel %vm1000, %v985, 0
      %v1008 = vsel %vm1000, %v986, 0
      %v1011 = vsel %vm1000, %v987, 0
      %v1014 = vsel %vm1000, %v988, 0
      %v1017 = vsel %vm1000, %v989, 0
      %v1020 = vsel %vm1000, %v990, 0
      %v1023 = vsel %vm1000, %v991, 0
      %v1026 = vsel %vm1000, %v992, 0
      %v1029 = vsel %vm1000, %v993, 0
      %v1032 = vsel %vm1000, %v994, 0
      %v1035 = vsel %vm1000, %v995, 0
      %v1038 = vsel %vm1000, %v996, 0
      %v1041 = vsel %vm1000, %v997, 0
      %v1044 = vsel %vm1000, %v998, 0
      %v1047 = vsel %vm1000, %v999, 0
      %1049 = vmatprep.subr.mxu0 0.0
      %1050 = vmatpush1.msra.mxu0 %v377
      %1051 = vmatprep.subr.mxu0 0.0
      %1052 = vmatpush1.msra.mxu0 %v378
      %1053 = vmatprep.subr.mxu0 0.0
      %1054 = vmatpush1.msra.mxu0 %v379
      %1055 = vmatprep.subr.mxu0 0.0
      %1056 = vmatpush1.msra.mxu0 %v380
      %1057 = vmatprep.subr.mxu0 0.0
      %1058 = vmatpush1.msra.mxu0 %v381
      %1059 = vmatprep.subr.mxu0 0.0
      %1060 = vmatpush1.msra.mxu0 %v382
      %1061 = vmatprep.subr.mxu0 0.0
      %1062 = vmatpush1.msra.mxu0 %v383
      %1063 = vmatprep.subr.mxu0 0.0
      %1064 = vmatpush1.msra.mxu0 %v384
      %1065 = vmatprep.subr.mxu0 0.0
      %1066 = vmatpush1.msra.mxu0 %v385
      %1067 = vmatprep.subr.mxu0 0.0
      %1068 = vmatpush1.msra.mxu0 %v386
      %1069 = vmatprep.subr.mxu0 0.0
      %1070 = vmatpush1.msra.mxu0 0.0
      %1071 = vmatprep.subr.mxu0 0.0
      %1072 = vmatpush1.msra.mxu0 0.0
      %1073 = vmatprep.subr.mxu0 0.0
      %1074 = vmatpush1.msra.mxu0 0.0
      %1075 = vmatprep.subr.mxu0 0.0
      %1076 = vmatpush1.msra.mxu0 0.0
      %1077 = vmatprep.subr.mxu0 0.0
      %1078 = vmatpush1.msra.mxu0 0.0
      %1079 = vmatprep.subr.mxu0 0.0
      %1080 = vmatpush1.msra.mxu0 0.0
      %1081 = vmatprep.subr.mxu0 0.0
      %1082 = vmatpush1.msra.mxu0 0.0
      %1083 = vmatprep.subr.mxu0 0.0
      %1084 = vmatpush1.msra.mxu0 0.0
      %1085 = vmatprep.subr.mxu0 0.0
      %1086 = vmatpush1.msra.mxu0 0.0
      %1087 = vmatprep.subr.mxu0 0.0
      %1088 = vmatpush1.msra.mxu0 0.0
      %1089 = vmatprep.subr.mxu0 0.0
      %1090 = vmatpush1.msra.mxu0 0.0
      %1091 = vmatprep.subr.mxu0 0.0
      %1092 = vmatpush1.msra.mxu0 0.0
      %1093 = vmatprep.subr.mxu0 0.0
      %1094 = vmatpush1.msra.mxu0 0.0
      %1095 = vmatprep.subr.mxu0 0.0
      %1096 = vmatpush1.msra.mxu0 0.0
      %1097 = vmatprep.subr.mxu0 0.0
      %1098 = vmatpush1.msra.mxu0 0.0
      %1099 = vmatprep.subr.mxu0 0.0
      %1100 = vmatpush1.msra.mxu0 0.0
      %1101 = vmatprep.subr.mxu0 0.0
      %1102 = vmatpush1.msra.mxu0 0.0
      %1103 = vmatprep.subr.mxu0 0.0
      %1104 = vmatpush1.msra.mxu0 0.0
      %1105 = vmatprep.subr.mxu0 0.0
      %1106 = vmatpush1.msra.mxu0 0.0
      %1107 = vmatprep.subr.mxu0 0.0
      %1108 = vmatpush1.msra.mxu0 0.0
      %1109 = vmatprep.subr.mxu0 0.0
      %1110 = vmatpush1.msra.mxu0 0.0
      %1111 = vmatprep.subr.mxu0 0.0
      %1112 = vmatpush1.msra.mxu0 0.0
      %1113 = vmatprep.mubr.f32.mxu0 0.0
      %1114 = vmatmul.mubr.f32.gmra.mrb[0].mxu0 %v1002
      %v1115 = vpop.f32.mrb[0].mxu0
      %v1116 = vadd.f32 0.0, %v1115
      %v1117 = vpop.f32.mrb[0].mxu0
      %1118 = vmatprep.mubr.f32.mxu0 0.0
      %1119 = vmatmul.mubr.f32.gmra.mrb[0].mxu0 %v1005
      %v1120 = vpop.f32.mrb[0].mxu0
      %v1121 = vadd.f32 0.0, %v1120
      %v1122 = vpop.f32.mrb[0].mxu0
      %1123 = vmatprep.mubr.f32.mxu0 0.0
      %1124 = vmatmul.mubr.f32.gmra.mrb[0].mxu0 %v1008
      %v1125 = vpop.f32.mrb[0].mxu0
      %v1126 = vadd.f32 0.0, %v1125
      %v1127 = vpop.f32.mrb[0].mxu0
      %1128 = vmatprep.mubr.f32.mxu0 0.0
      %1129 = vmatmul.mubr.f32.gmra.mrb[0].mxu0 %v1011
      %v1130 = vpop.f32.mrb[0].mxu0
      %v1131 = vadd.f32 0.0, %v1130
      %v1132 = vpop.f32.mrb[0].mxu0
      %1133 = vmatprep.mubr.f32.mxu0 0.0
      %1134 = vmatmul.mubr.f32.gmra.mrb[0].mxu0 %v1014
      %v1135 = vpop.f32.mrb[0].mxu0
      %v1136 = vadd.f32 0.0, %v1135
      %v1137 = vpop.f32.mrb[0].mxu0
      %1138 = vmatprep.mubr.f32.mxu0 0.0
      %1139 = vmatmul.mubr.f32.gmra.mrb[0].mxu0 %v1017
      %v1140 = vpop.f32.mrb[0].mxu0
      %v1141 = vadd.f32 0.0, %v1140
      %v1142 = vpop.f32.mrb[0].mxu0
      %1143 = vmatprep.mubr.f32.mxu0 0.0
      %1144 = vmatmul.mubr.f32.gmra.mrb[0].mxu0 %v1020
      %v1145 = vpop.f32.mrb[0].mxu0
      %v1146 = vadd.f32 0.0, %v1145
      %v1147 = vpop.f32.mrb[0].mxu0
      %1148 = vmatprep.mubr.f32.mxu0 0.0
      %1149 = vmatmul.mubr.f32.gmra.mrb[0].mxu0 %v1023
      %v1150 = vpop.f32.mrb[0].mxu0
      %v1151 = vadd.f32 0.0, %v1150
      %v1152 = vpop.f32.mrb[0].mxu0
      %1153 = vmatprep.mubr.f32.mxu0 0.0
      %1154 = vmatmul.mubr.f32.gmra.mrb[0].mxu0 %v1026
      %v1155 = vpop.f32.mrb[0].mxu0
      %v1156 = vadd.f32 0.0, %v1155
      %v1157 = vpop.f32.mrb[0].mxu0
      %1158 = vmatprep.mubr.f32.mxu0 0.0
      %1159 = vmatmul.mubr.f32.gmra.mrb[0].mxu0 %v1029
      %v1160 = vpop.f32.mrb[0].mxu0
      %v1161 = vadd.f32 0.0, %v1160
      %v1162 = vpop.f32.mrb[0].mxu0
      %1163 = vmatprep.mubr.f32.mxu0 0.0
      %1164 = vmatmul.mubr.f32.gmra.mrb[0].mxu0 %v1032
      %v1165 = vpop.f32.mrb[0].mxu0
      %v1166 = vadd.f32 0.0, %v1165
      %v1167 = vpop.f32.mrb[0].mxu0
      %1168 = vmatprep.mubr.f32.mxu0 0.0
      %1169 = vmatmul.mubr.f32.gmra.mrb[0].mxu0 %v1035
      %v1170 = vpop.f32.mrb[0].mxu0
      %v1171 = vadd.f32 0.0, %v1170
      %v1172 = vpop.f32.mrb[0].mxu0
      %1173 = vmatprep.mubr.f32.mxu0 0.0
      %1174 = vmatmul.mubr.f32.gmra.mrb[0].mxu0 %v1038
      %v1175 = vpop.f32.mrb[0].mxu0
      %v1176 = vadd.f32 0.0, %v1175
      %v1177 = vpop.f32.mrb[0].mxu0
      %1178 = vmatprep.mubr.f32.mxu0 0.0
      %1179 = vmatmul.mubr.f32.gmra.mrb[0].mxu0 %v1041
      %v1180 = vpop.f32.mrb[0].mxu0
      %v1181 = vadd.f32 0.0, %v1180
      %v1182 = vpop.f32.mrb[0].mxu0
      %1183 = vmatprep.mubr.f32.mxu0 0.0
      %1184 = vmatmul.mubr.f32.gmra.mrb[0].mxu0 %v1044
      %v1185 = vpop.f32.mrb[0].mxu0
      %v1186 = vadd.f32 0.0, %v1185
      %v1187 = vpop.f32.mrb[0].mxu0
      %1188 = vmatprep.mubr.f32.mxu0 0.0
      %1189 = vmatmul.mubr.f32.gmra.mrb[0].mxu0 %v1047
      %v1190 = vpop.f32.mrb[0].mxu0
      %v1191 = vadd.f32 0.0, %v1190
      %v1192 = vpop.f32.mrb[0].mxu0
      %1193 = vdwg.mxu0
      %v1194 = vadd.f32 %v952, %v1116
      %v1195 = vadd.f32 %v953, %v1121
      %v1196 = vadd.f32 %v954, %v1126
      %v1197 = vadd.f32 %v955, %v1131
      %v1198 = vadd.f32 %v956, %v1136
      %v1199 = vadd.f32 %v957, %v1141
      %v1200 = vadd.f32 %v958, %v1146
      %v1201 = vadd.f32 %v959, %v1151
      %v1202 = vadd.f32 %v960, %v1156
      %v1203 = vadd.f32 %v961, %v1161
      %v1204 = vadd.f32 %v962, %v1166
      %v1205 = vadd.f32 %v963, %v1171
      %v1206 = vadd.f32 %v964, %v1176
      %v1207 = vadd.f32 %v965, %v1181
      %v1208 = vadd.f32 %v966, %v1186
      %v1209 = vadd.f32 %v967, %v1191
      %1210 = vst.msk [vmem:[%s349] sm:$0xff] %vm404, %v1194
      %1211 = vst.msk [vmem:[%s349 + $0x8] sm:$0xff] %vm404, %v1195
      %1212 = vst.msk [vmem:[%s349 + $0x10] sm:$0xff] %vm404, %v1196
      %1213 = vst.msk [vmem:[%s349 + $0x18] sm:$0xff] %vm404, %v1197
      %1214 = vst.msk [vmem:[%s349 + $0x20] sm:$0xff] %vm404, %v1198
      %1215 = vst.msk [vmem:[%s349 + $0x28] sm:$0xff] %vm404, %v1199
      %1216 = vst.msk [vmem:[%s349 + $0x30] sm:$0xff] %vm404, %v1200
      %1217 = vst.msk [vmem:[%s349 + $0x38] sm:$0xff] %vm404, %v1201
      %1218 = vst.msk [vmem:[%s349 + $0x40] sm:$0xff] %vm404, %v1202
      %1219 = vst.msk [vmem:[%s349 + $0x48] sm:$0xff] %vm404, %v1203
      %1220 = vst.msk [vmem:[%s349 + $0x50] sm:$0xff] %vm404, %v1204
      %1221 = vst.msk [vmem:[%s349 + $0x58] sm:$0xff] %vm404, %v1205
      %1222 = vst.msk [vmem:[%s349 + $0x60] sm:$0xff] %vm404, %v1206
      %1223 = vst.msk [vmem:[%s349 + $0x68] sm:$0xff] %vm404, %v1207
      %1224 = vst.msk [vmem:[%s349 + $0x70] sm:$0xff] %vm404, %v1208
      %1225 = vst.msk [vmem:[%s349 + $0x78] sm:$0xff] %vm404, %v1209
      %v1226 = vsub.f32 %v883, %v377
      %v1227 = vsub.f32 %v888, %v378
      %v1228 = vsub.f32 %v893, %v379
      %v1229 = vsub.f32 %v898, %v380
      %v1230 = vsub.f32 %v903, %v381
      %v1231 = vsub.f32 %v908, %v382
      %v1232 = vsub.f32 %v913, %v383
      %v1233 = vsub.f32 %v918, %v384
      %v1234 = vsub.f32 %v923, %v385
      %v1235 = vsub.f32 %v928, %v386
      %s1236 = sadd.s32 %s23, %s24
      %s1237 = smul.u32 %s1236, 80
      %s1238 = sadd.s32 %s1237, 80
      %p1239 = scmp.le.s32.totalorder %s1238, 144
      // Predicated region
      $region37: #{vector_quantizer_ema_forward.1} parent=31 // pred_check
        %p1240 = pneg %p1239
      $region38: #{vector_quantizer_ema_forward.1} parent=31 // pred_check_branch
        %1242 = sbr.rel (%p1240) target = $region40
      $region39: #{vector_quantizer_ema_forward.1} parent=31 // pred_region
        %v1243 = vld [vmem:[%s344] sm:$0x1]
        %v1244 = vadd.f32 %v806, %v807
        %v1245 = vadd.f32 %v1244, %v808
        %v1246 = vadd.f32 %v1245, %v809
        %v1247 = vadd.f32 %v1246, %v810
        %v1248 = vadd.f32 %v1247, %v811
        %v1249 = vadd.f32 %v1248, %v812
        %v1250 = vadd.f32 %v1249, %v813
        %v1251 = vadd.f32 %v1250, %v814
        %v1252 = vadd.f32 %v1251, %v815
        %v1253 = vrot.slane %v1252, 4
        %v1254 = vadd.f32 %v1252, %v1253
        %v1255 = vrot.slane %v1254, 2
        %v1256 = vadd.f32 %v1254, %v1255
        %v1257 = vrot.slane %v1256, 1
        %v1258 = vadd.f32 %v1256, %v1257
        %v1259 = vadd.f32 %v1243, %v1258
        %1260 = vst [vmem:[%s344] sm:$0x1] %v1259
        %v1261 = vld [vmem:[%s352] sm:$0x1]
        %v1262 = vmul.f32 %v1226, %v1226
        %v1263 = vmul.f32 %v1227, %v1227
        %v1264 = vmul.f32 %v1228, %v1228
        %v1265 = vmul.f32 %v1229, %v1229
        %v1266 = vmul.f32 %v1230, %v1230
        %v1267 = vmul.f32 %v1231, %v1231
        %v1268 = vmul.f32 %v1232, %v1232
        %v1269 = vmul.f32 %v1233, %v1233
        %v1270 = vmul.f32 %v1234, %v1234
        %v1271 = vmul.f32 %v1235, %v1235
        %v1272 = vsel %vm404, %v1262, 0.0
        %1273 = vadd.xlane.f32.xlu0 %v1272
        %v1274 = vpop.xlane.xlu0 %1273
        %v1275 = vsel %vm404, %v1263, 0.0
        %1276 = vadd.xlane.f32.xlu0 %v1275
        %v1277 = vpop.xlane.xlu0 %1276
        %v1278 = vsel %vm404, %v1264, 0.0
        %1279 = vadd.xlane.f32.xlu0 %v1278
        %v1280 = vpop.xlane.xlu0 %1279
        %v1281 = vsel %vm404, %v1265, 0.0
        %1282 = vadd.xlane.f32.xlu0 %v1281
        %v1283 = vpop.xlane.xlu0 %1282
        %v1284 = vsel %vm404, %v1266, 0.0
        %1285 = vadd.xlane.f32.xlu0 %v1284
        %v1286 = vpop.xlane.xlu0 %1285
        %v1287 = vsel %vm404, %v1267, 0.0
        %1288 = vadd.xlane.f32.xlu0 %v1287
        %v1289 = vpop.xlane.xlu0 %1288
        %v1290 = vsel %vm404, %v1268, 0.0
        %1291 = vadd.xlane.f32.xlu0 %v1290
        %v1292 = vpop.xlane.xlu0 %1291
        %v1293 = vsel %vm404, %v1269, 0.0
        %1294 = vadd.xlane.f32.xlu0 %v1293
        %v1295 = vpop.xlane.xlu0 %1294
        %v1296 = vsel %vm404, %v1270, 0.0
        %1297 = vadd.xlane.f32.xlu0 %v1296
        %v1298 = vpop.xlane.xlu0 %1297
        %v1299 = vsel %vm404, %v1271, 0.0
        %1300 = vadd.xlane.f32.xlu0 %v1299
        %v1301 = vpop.xlane.xlu0 %1300
        %v1302 = vadd.f32 %v1274, %v1277
        %v1303 = vadd.f32 %v1302, %v1280
        %v1304 = vadd.f32 %v1303, %v1283
        %v1305 = vadd.f32 %v1304, %v1286
        %v1306 = vadd.f32 %v1305, %v1289
        %v1307 = vadd.f32 %v1306, %v1292
        %v1308 = vadd.f32 %v1307, %v1295
        %v1309 = vadd.f32 %v1308, %v1298
        %v1310 = vadd.f32 %v1309, %v1301
        %v1311 = vrot.slane %v1310, 4
        %v1312 = vadd.f32 %v1310, %v1311
        %v1313 = vrot.slane %v1312, 2
        %v1314 = vadd.f32 %v1312, %v1313
        %v1315 = vrot.slane %v1314, 1
        %v1316 = vadd.f32 %v1314, %v1315
        %v1317 = vadd.f32 %v1261, %v1316
        %vm1318 = vcmask 0
        %1319 = vst.msk [vmem:[%s352] sm:$0x1] %vm1318, %v1317
      $region40: #{vector_quantizer_ema_forward.1} parent=31 // pred_fallthru
        _
      %p1320 = scmp.lt.s32.totalorder %s1237, 144
      %p1321 = scmp.gt.s32.totalorder %s1238, 144
      %p1322 = pnand %p1320, %p1321
      %p1323 = pneg %p1322
      // Predicated region
      $region41: #{vector_quantizer_ema_forward.1} parent=31 // pred_check
        _
      $region42: #{vector_quantizer_ema_forward.1} parent=31 // pred_check_branch
        %1325 = sbr.rel (%p1322) target = $region44
      $region43: #{vector_quantizer_ema_forward.1} parent=31 // pred_region
        %v1326 = vlaneseq
        %v1327 = vshrl.u32 %v1326, 7
        %v1328 = vadd.s32 %v1327, 8
        %v1329 = vadd.s32 %v1327, 16
        %v1330 = vadd.s32 %v1327, 24
        %v1331 = vadd.s32 %v1327, 32
        %v1332 = vadd.s32 %v1327, 40
        %v1333 = vadd.s32 %v1327, 48
        %v1334 = vadd.s32 %v1327, 56
        %v1335 = vadd.s32 %v1327, 64
        %v1336 = vadd.s32 %v1327, 72
        %v1337 = vstv %s1237
        %v1338 = vadd.s32 %v1327, %v1337
        %v1339 = vadd.s32 %v1328, %v1337
        %v1340 = vadd.s32 %v1329, %v1337
        %v1341 = vadd.s32 %v1330, %v1337
        %v1342 = vadd.s32 %v1331, %v1337
        %v1343 = vadd.s32 %v1332, %v1337
        %v1344 = vadd.s32 %v1333, %v1337
        %v1345 = vadd.s32 %v1334, %v1337
        %v1346 = vadd.s32 %v1335, %v1337
        %v1347 = vadd.s32 %v1336, %v1337
        %vm1348 = vcmp.lt.s32.totalorder %v1338, 144
        %vm1349 = vcmp.lt.s32.totalorder %v1339, 144
        %vm1350 = vcmp.lt.s32.totalorder %v1340, 144
        %vm1351 = vcmp.lt.s32.totalorder %v1341, 144
        %vm1352 = vcmp.lt.s32.totalorder %v1342, 144
        %vm1353 = vcmp.lt.s32.totalorder %v1343, 144
        %vm1354 = vcmp.lt.s32.totalorder %v1344, 144
        %vm1355 = vcmp.lt.s32.totalorder %v1345, 144
        %vm1356 = vcmp.lt.s32.totalorder %v1346, 144
        %vm1357 = vcmp.lt.s32.totalorder %v1347, 144
        %v1358 = vsel %vm1348, 1, 0
        %v1359 = vsel %vm1349, 1, 0
        %v1360 = vsel %vm1350, 1, 0
        %v1361 = vsel %vm1351, 1, 0
        %v1362 = vsel %vm1352, 1, 0
        %v1363 = vsel %vm1353, 1, 0
        %v1364 = vsel %vm1354, 1, 0
        %v1365 = vsel %vm1355, 1, 0
        %v1366 = vsel %vm1356, 1, 0
        %v1367 = vsel %vm1357, 1, 0
        %v1368 = vcvt.s32.f32 %v1358
        %v1369 = vcvt.s32.f32 %v1359
        %v1370 = vcvt.s32.f32 %v1360
        %v1371 = vcvt.s32.f32 %v1361
        %v1372 = vcvt.s32.f32 %v1362
        %v1373 = vcvt.s32.f32 %v1363
        %v1374 = vcvt.s32.f32 %v1364
        %v1375 = vcvt.s32.f32 %v1365
        %v1376 = vcvt.s32.f32 %v1366
        %v1377 = vcvt.s32.f32 %v1367
        %v1378 = vmul.f32 %v806, %v1368
        %v1379 = vmul.f32 %v807, %v1369
        %v1380 = vmul.f32 %v808, %v1370
        %v1381 = vmul.f32 %v809, %v1371
        %v1382 = vmul.f32 %v810, %v1372
        %v1383 = vmul.f32 %v811, %v1373
        %v1384 = vmul.f32 %v812, %v1374
        %v1385 = vmul.f32 %v813, %v1375
        %v1386 = vmul.f32 %v814, %v1376
        %v1387 = vmul.f32 %v815, %v1377
        %v1388 = vmul.f32 %v1226, %v1368
        %v1389 = vmul.f32 %v1227, %v1369
        %v1390 = vmul.f32 %v1228, %v1370
        %v1391 = vmul.f32 %v1229, %v1371
        %v1392 = vmul.f32 %v1230, %v1372
        %v1393 = vmul.f32 %v1231, %v1373
        %v1394 = vmul.f32 %v1232, %v1374
        %v1395 = vmul.f32 %v1233, %v1375
        %v1396 = vmul.f32 %v1234, %v1376
        %v1397 = vmul.f32 %v1235, %v1377
        %v1398 = vld [vmem:[%s344] sm:$0x1]
        %v1399 = vadd.f32 %v1378, %v1379
        %v1400 = vadd.f32 %v1399, %v1380
        %v1401 = vadd.f32 %v1400, %v1381
        %v1402 = vadd.f32 %v1401, %v1382
        %v1403 = vadd.f32 %v1402, %v1383
        %v1404 = vadd.f32 %v1403, %v1384
        %v1405 = vadd.f32 %v1404, %v1385
        %v1406 = vadd.f32 %v1405, %v1386
        %v1407 = vadd.f32 %v1406, %v1387
        %v1408 = vrot.slane %v1407, 4
        %v1409 = vadd.f32 %v1407, %v1408
        %v1410 = vrot.slane %v1409, 2
        %v1411 = vadd.f32 %v1409, %v1410
        %v1412 = vrot.slane %v1411, 1
        %v1413 = vadd.f32 %v1411, %v1412
        %v1414 = vadd.f32 %v1398, %v1413
        %1415 = vst [vmem:[%s344] sm:$0x1] %v1414
        %v1416 = vld [vmem:[%s352] sm:$0x1]
        %v1417 = vmul.f32 %v1388, %v1388
        %v1418 = vmul.f32 %v1389, %v1389
        %v1419 = vmul.f32 %v1390, %v1390
        %v1420 = vmul.f32 %v1391, %v1391
        %v1421 = vmul.f32 %v1392, %v1392
        %v1422 = vmul.f32 %v1393, %v1393
        %v1423 = vmul.f32 %v1394, %v1394
        %v1424 = vmul.f32 %v1395, %v1395
        %v1425 = vmul.f32 %v1396, %v1396
        %v1426 = vmul.f32 %v1397, %v1397
        %v1427 = vsel %vm404, %v1417, 0.0
        %1428 = vadd.xlane.f32.xlu0 %v1427
        %v1429 = vpop.xlane.xlu0 %1428
        %v1430 = vsel %vm404, %v1418, 0.0
        %1431 = vadd.xlane.f32.xlu0 %v1430
        %v1432 = vpop.xlane.xlu0 %1431
        %v1433 = vsel %vm404, %v1419, 0.0
        %1434 = vadd.xlane.f32.xlu0 %v1433
        %v1435 = vpop.xlane.xlu0 %1434
        %v1436 = vsel %vm404, %v1420, 0.0
        %1437 = vadd.xlane.f32.xlu0 %v1436
        %v1438 = vpop.xlane.xlu0 %1437
        %v1439 = vsel %vm404, %v1421, 0.0
        %1440 = vadd.xlane.f32.xlu0 %v1439
        %v1441 = vpop.xlane.xlu0 %1440
        %v1442 = vsel %vm404, %v1422, 0.0
        %1443 = vadd.xlane.f32.xlu0 %v1442
        %v1444 = vpop.xlane.xlu0 %1443
        %v1445 = vsel %vm404, %v1423, 0.0
        %1446 = vadd.xlane.f32.xlu0 %v1445
        %v1447 = vpop.xlane.xlu0 %1446
        %v1448 = vsel %vm404, %v1424, 0.0
        %1449 = vadd.xlane.f32.xlu0 %v1448
        %v1450 = vpop.xlane.xlu0 %1449
        %v1451 = vsel %vm404, %v1425, 0.0
        %1452 = vadd.xlane.f32.xlu0 %v1451
        %v1453 = vpop.xlane.xlu0 %1452
        %v1454 = vsel %vm404, %v1426, 0.0
        %1455 = vadd.xlane.f32.xlu0 %v1454
        %v1456 = vpop.xlane.xlu0 %1455
        %v1457 = vadd.f32 %v1429, %v1432
        %v1458 = vadd.f32 %v1457, %v1435
        %v1459 = vadd.f32 %v1458, %v1438
        %v1460 = vadd.f32 %v1459, %v1441
        %v1461 = vadd.f32 %v1460, %v1444
        %v1462 = vadd.f32 %v1461, %v1447
        %v1463 = vadd.f32 %v1462, %v1450
        %v1464 = vadd.f32 %v1463, %v1453
        %v1465 = vadd.f32 %v1464, %v1456
        %v1466 = vrot.slane %v1465, 4
        %v1467 = vadd.f32 %v1465, %v1466
        %v1468 = vrot.slane %v1467, 2
        %v1469 = vadd.f32 %v1467, %v1468
        %v1470 = vrot.slane %v1469, 1
        %v1471 = vadd.f32 %v1469, %v1470
        %v1472 = vadd.f32 %v1416, %v1471
        %vm1473 = vcmask 0
        %1474 = vst.msk [vmem:[%s352] sm:$0x1] %vm1473, %v1472
      $region44: #{vector_quantizer_ema_forward.1} parent=31 // pred_fallthru
        _
      %s1475 = sadd.s32 %s23, %s24
      %s1476 = smul.u32 10, %s1475
      %p1477 = scmp.lt.s32.totalorder %s1476, 19
      %s1478 = scalar_select %p1477, %s1476, 19
      %s1479 = smul.addr %s1478, 8
      %s1480 = scalar_lea.vmem %s3, %s1479
      %s1481 = sadd.s32 %s23, %s24
      %s1482 = smul.u32 10, %s1481
      %p1483 = scmp.lt.s32.totalorder %s1482, 19
      %s1484 = scalar_select %p1483, %s1482, 19
      %s1485 = smul.addr %s1484, 8
      %s1486 = scalar_lea.vmem %s4, %s1485
      %p1487 = scmp.lt.s32.totalorder %s23, 1
      %s1488 = scalar_select %p1487, %s23, 1
      %s1489 = scalar_lea.vmem %s5, %s1488
      %p1490 = scmp.lt.s32.totalorder %s23, 1
      %s1491 = scalar_select %p1490, %s23, 1
      %s1492 = smul.addr %s1491, 16
      %s1493 = smul.addr %s1492, 8
      %s1494 = scalar_lea.vmem %s6, %s1493
      %p1495 = scmp.lt.s32.totalorder %s23, 1
      %s1496 = scalar_select %p1495, %s23, 1
      %s1497 = scalar_lea.vmem %s7, %s1496
      // Predicated region
      $region45: #{vector_quantizer_ema_forward.1} parent=31 // pred_check
        %p1498 = pneg %p121
      $region46: #{vector_quantizer_ema_forward.1} parent=31 // pred_check_branch
        %1500 = sbr.rel (%p1498) target = $region48
      $region47: #{vector_quantizer_ema_forward.1} parent=31 // pred_region
        %s1501 = sadd.s32 %s23, %s24
        %s1502 = smul.u32 10, %s1501
      $region48: #{vector_quantizer_ema_forward.1} parent=31 // pred_fallthru
        _
      // Predicated region
      $region49: #{vector_quantizer_ema_forward.1} parent=31 // pred_check
        %p1503 = pneg %p149
      $region50: #{vector_quantizer_ema_forward.1} parent=31 // pred_check_branch
        %1505 = sbr.rel (%p1503) target = $region52
      $region51: #{vector_quantizer_ema_forward.1} parent=31 // pred_region
        %s1506 = sadd.s32 %s23, %s24
        %s1507 = smul.u32 10, %s1506
      $region52: #{vector_quantizer_ema_forward.1} parent=31 // pred_fallthru
        _
      // Predicated region
      $region53: #{vector_quantizer_ema_forward.1} parent=31 // pred_check
        %p1508 = pneg %p175
      $region54: #{vector_quantizer_ema_forward.1} parent=31 // pred_check_branch
        %1510 = sbr.rel (%p1508) target = $region56
      $region55: #{vector_quantizer_ema_forward.1} parent=31 // pred_region
        _
      $region56: #{vector_quantizer_ema_forward.1} parent=31 // pred_fallthru
        _
      // Predicated region
      $region57: #{vector_quantizer_ema_forward.1} parent=31 // pred_check
        %p1511 = pneg %p201
      $region58: #{vector_quantizer_ema_forward.1} parent=31 // pred_check_branch
        %1513 = sbr.rel (%p1511) target = $region60
      $region59: #{vector_quantizer_ema_forward.1} parent=31 // pred_region
        _
      $region60: #{vector_quantizer_ema_forward.1} parent=31 // pred_fallthru
        _
      // Predicated region
      $region61: #{vector_quantizer_ema_forward.1} parent=31 // pred_check
        %p1514 = pneg %p227
      $region62: #{vector_quantizer_ema_forward.1} parent=31 // pred_check_branch
        %1516 = sbr.rel (%p1514) target = $region64
      $region63: #{vector_quantizer_ema_forward.1} parent=31 // pred_region
        _
      $region64: #{vector_quantizer_ema_forward.1} parent=31 // pred_fallthru
        _
    $region32: #{vector_quantizer_ema_forward.1} parent=5 // pred_fallthru
      _
    %p1517 = scmp.le.s32.totalorder 2, %s14
    // Predicated region
    $region65: #{vector_quantizer_ema_forward.1} parent=5 // pred_check
      %p1518 = pneg %p1517
    $region66: #{vector_quantizer_ema_forward.1} parent=5 // pred_check_branch
      %1520 = sbr.rel (%p1518) target = $region68
    $region67: #{vector_quantizer_ema_forward.1} parent=5 // pred_region
      %s1521 = ssub.s32 %s14, 2
      // Predicated region
      $region69: #{vector_quantizer_ema_forward.1} parent=67 // pred_check
        %p1522 = pneg %p127
      $region70: #{vector_quantizer_ema_forward.1} parent=67 // pred_check_branch
        %1524 = sbr.rel (%p1522) target = $region72
      $region71: #{vector_quantizer_ema_forward.1} parent=67 // pred_region
        %s1525 = sadd.s32 %s25, %s26
        %s1526 = smul.u32 10, %s1525
        %p1527 = scmp.lt.s32.totalorder %s1526, 19
        %s1528 = scalar_select %p1527, %s1526, 19
        %s1529 = smul.addr %s1528, 8
        %s1530 = scalar_lea.vmem %s3, %s1529
      $region72: #{vector_quantizer_ema_forward.1} parent=67 // pred_fallthru
        _
      // Predicated region
      $region73: #{vector_quantizer_ema_forward.1} parent=67 // pred_check
        %p1531 = pneg %p155
      $region74: #{vector_quantizer_ema_forward.1} parent=67 // pred_check_branch
        %1533 = sbr.rel (%p1531) target = $region76
      $region75: #{vector_quantizer_ema_forward.1} parent=67 // pred_region
        %s1534 = sadd.s32 %s25, %s26
        %s1535 = smul.u32 10, %s1534
        %p1536 = scmp.lt.s32.totalorder %s1535, 19
        %s1537 = scalar_select %p1536, %s1535, 19
        %s1538 = smul.addr %s1537, 8
        %s1539 = scalar_lea.vmem %s4, %s1538
      $region76: #{vector_quantizer_ema_forward.1} parent=67 // pred_fallthru
        _
      // Predicated region
      $region77: #{vector_quantizer_ema_forward.1} parent=67 // pred_check
        %p1540 = pneg %p181
      $region78: #{vector_quantizer_ema_forward.1} parent=67 // pred_check_branch
        %1542 = sbr.rel (%p1540) target = $region80
      $region79: #{vector_quantizer_ema_forward.1} parent=67 // pred_region
        %p1543 = scmp.lt.s32.totalorder %s25, 1
        %s1544 = scalar_select %p1543, %s25, 1
        %s1545 = scalar_lea.vmem %s5, %s1544
      $region80: #{vector_quantizer_ema_forward.1} parent=67 // pred_fallthru
        _
      // Predicated region
      $region81: #{vector_quantizer_ema_forward.1} parent=67 // pred_check
        %p1546 = pneg %p207
      $region82: #{vector_quantizer_ema_forward.1} parent=67 // pred_check_branch
        %1548 = sbr.rel (%p1546) target = $region84
      $region83: #{vector_quantizer_ema_forward.1} parent=67 // pred_region
        %p1549 = scmp.lt.s32.totalorder %s25, 1
        %s1550 = scalar_select %p1549, %s25, 1
        %s1551 = smul.addr %s1550, 16
        %s1552 = smul.addr %s1551, 8
        %s1553 = scalar_lea.vmem %s6, %s1552
      $region84: #{vector_quantizer_ema_forward.1} parent=67 // pred_fallthru
        _
      // Predicated region
      $region85: #{vector_quantizer_ema_forward.1} parent=67 // pred_check
        %p1554 = pneg %p233
      $region86: #{vector_quantizer_ema_forward.1} parent=67 // pred_check_branch
        %1556 = sbr.rel (%p1554) target = $region88
      $region87: #{vector_quantizer_ema_forward.1} parent=67 // pred_region
        %p1557 = scmp.lt.s32.totalorder %s25, 1
        %s1558 = scalar_select %p1557, %s25, 1
        %s1559 = scalar_lea.vmem %s7, %s1558
      $region88: #{vector_quantizer_ema_forward.1} parent=67 // pred_fallthru
        _
    $region68: #{vector_quantizer_ema_forward.1} parent=5 // pred_fallthru
      _
  $region6: #{vector_quantizer_ema_forward.1} parent=0 // loop_footer
    %s18 = sadd.s32 1, %s14
  $region7: #{vector_quantizer_ema_forward.1} parent=0 // loop_footer_branch
    %13 = sbr.rel target = $region3
  $region8: #{vector_quantizer_ema_forward.1} parent=0 // loop_exit
    _

</llo_original>
